<compile_context>
chip_gen: v6e
topology: v6e:2x2x1
jax: 0.10.0
libtpu: 0.0.40
codegen_flags: <defaults>
</compile_context>

<pallas_src>
import functools

import jax
import jax.numpy as jnp
from jax.experimental import pallas as pl
from jax.experimental.pallas import tpu as pltpu


def _round_up(n, m):
    return ((n + m - 1) // m) * m


def _pick_time_block(T, max_block):
    """Prefer an exact divisor of T (no padded steps); otherwise pad."""
    max_block = max(1, min(T, max_block))
    for d in range(max_block, max(1, max_block // 2) - 1, -1):
        if T % d == 0:
            return d
    return max_block


def _lstm_fc_kernel(xp_ref, whh_ref, wfc_ref, bfc_ref, out_ref, h_ref, c_ref,
                    *, hidden_pad, time_block):
    """One grid step == `time_block` LSTM time steps.

    xp_ref : (Tb, Bp, 4*Hp) precomputed x @ W_ih^T + b (gate-major, padded)
    whh_ref: (Hp, 4*Hp)     W_hh^T, gate-major padded layout
    wfc_ref: (Hp, Op)       W_fc^T (padded)
    bfc_ref: (1, Op)        b_fc   (padded)
    out_ref: (Bp, Op)       final output (written at the last grid step)
    h_ref, c_ref: (Bp, Hp)  VMEM scratch carrying the recurrent state.
    """
    t = pl.program_id(0)

    @pl.when(t == 0)
    def _():
        h_ref[...] = jnp.zeros_like(h_ref)
        c_ref[...] = jnp.zeros_like(c_ref)

    Hp = hidden_pad
    whh = whh_ref[...]            # hoist the (Hp, 4Hp) load out of the loop

    def step(i, carry):
        h, c = carry
        # gates: (Bp, 4Hp); each gate occupies whole 128-lane tiles.
        gates = xp_ref[i] + jnp.dot(h, whh,
                                    preferred_element_type=jnp.float32)
        i_g = jax.nn.sigmoid(gates[:, 0 * Hp:1 * Hp])
        f_g = jax.nn.sigmoid(gates[:, 1 * Hp:2 * Hp])
        g_g = jnp.tanh(gates[:, 2 * Hp:3 * Hp])
        o_g = jax.nn.sigmoid(gates[:, 3 * Hp:4 * Hp])
        c = f_g * c + i_g * g_g
        h = o_g * jnp.tanh(c)
        return h, c

    h, c = jax.lax.fori_loop(0, time_block, step,
                             (h_ref[...], c_ref[...]), unroll=True)
    h_ref[...] = h
    c_ref[...] = c

    @pl.when(t == pl.num_programs(0) - 1)
    def _():
        out_ref[...] = (jnp.dot(h, wfc_ref[...],
                                preferred_element_type=jnp.float32)
                        + bfc_ref[...])


def lstm_model_forward(x, params, *, time_block=16):
    """x: (B, T, input_size) float32 -> (B, output_size) float32."""
    w_ih = params["w_ih"].astype(jnp.float32)   # (4H, I)
    w_hh = params["w_hh"].astype(jnp.float32)   # (4H, H)
    b_ih = params["b_ih"].astype(jnp.float32)   # (4H,)
    b_hh = params["b_hh"].astype(jnp.float32)   # (4H,)
    w_fc = params["w_fc"].astype(jnp.float32)   # (O, H)
    b_fc = params["b_fc"].astype(jnp.float32)   # (O,)

    B, T, I = x.shape
    H = w_hh.shape[1]
    O = w_fc.shape[0]

    Hp = _round_up(H, 128)     # lane-align each gate slice
    Bp = _round_up(B, 8)       # sublane-align batch
    Op = _round_up(O, 128)     # lane-dense output store

    Tb = _pick_time_block(T, time_block)
    Tp = pl.cdiv(T, Tb) * Tb

    hi = jax.lax.Precision.HIGHEST

    # ---- gate-major padded parameter layouts (rows/cols [g*Hp+H, (g+1)*Hp)
    #      are zero, so padded gate pre-activations are exactly zero).
    wih_p = jnp.pad(w_ih.reshape(4, H, I),
                    ((0, 0), (0, Hp - H), (0, 0))).reshape(4 * Hp, I)
    bias_p = jnp.pad((b_ih + b_hh).reshape(4, H),
                     ((0, 0), (0, Hp - H))).reshape(4 * Hp)
    whh_p = jnp.pad(w_hh.T.reshape(H, 4, H),
                    ((0, Hp - H), (0, 0), (0, Hp - H))).reshape(Hp, 4 * Hp)
    wfc_p = jnp.pad(w_fc.T, ((0, Hp - H), (0, Op - O)))          # (Hp, Op)
    bfc_p = jnp.pad(b_fc, (0, Op - O)).reshape(1, Op)            # (1, Op)

    # ---- hoisted input projection: one big matmul off the serial path,
    #      bias folded in, produced directly in the (T, Bp, 4Hp) layout.
    x_p = jnp.pad(x.astype(jnp.float32), ((0, Bp - B), (0, 0), (0, 0)))
    xproj = jnp.einsum("bti,gi->tbg", x_p, wih_p, precision=hi) + bias_p
    # Left-pad the time axis with zero pre-activations: with h = c = 0 a
    # zero-pre-activation step is the identity (c stays 0, h stays 0), so the
    # final state is unchanged.
    xproj = jnp.pad(xproj, ((Tp - T, 0), (0, 0), (0, 0)))        # (Tp, Bp, 4Hp)

    kernel = functools.partial(_lstm_fc_kernel, hidden_pad=Hp, time_block=Tb)

    grid_spec = pltpu.PrefetchScalarGridSpec(
        num_scalar_prefetch=0,
        grid=(Tp // Tb,),
        in_specs=[
            pl.BlockSpec((Tb, Bp, 4 * Hp), lambda t: (t, 0, 0)),  # xproj slab
            pl.BlockSpec((Hp, 4 * Hp), lambda t: (0, 0)),         # W_hh^T
            pl.BlockSpec((Hp, Op), lambda t: (0, 0)),             # W_fc^T
            pl.BlockSpec((1, Op), lambda t: (0, 0)),              # b_fc
        ],
        out_specs=pl.BlockSpec((Bp, Op), lambda t: (0, 0)),
        scratch_shapes=[
            pltpu.VMEM((Bp, Hp), jnp.float32),                    # h state
            pltpu.VMEM((Bp, Hp), jnp.float32),                    # c state
        ],
    )

    out_padded = pl.pallas_call(
        kernel,
        out_shape=jax.ShapeDtypeStruct((Bp, Op), jnp.float32),
        grid_spec=grid_spec,
        compiler_params=pltpu.CompilerParams(
            dimension_semantics=("arbitrary",)),    # time is sequential
    )(xproj, whh_p, wfc_p, bfc_p)

    return out_padded[:B, :O]


def lstm_model_reference(x, params):
    """Pure-JAX reference matching torch.nn.LSTM + Linear semantics."""
    w_ih, w_hh, b_ih, b_hh, w_fc, b_fc = (
        params["w_ih"], params["w_hh"], params["b_ih"], params["b_hh"],
        params["w_fc"], params["b_fc"])
    B, T, I = x.shape
    H = w_hh.shape[1]
    hi = jax.lax.Precision.HIGHEST

    def step(carry, x_t):
        h, c = carry
        gates = (jnp.dot(x_t, w_ih.T, precision=hi)
                 + jnp.dot(h, w_hh.T, precision=hi) + b_ih + b_hh)
        i_g = jax.nn.sigmoid(gates[:, 0 * H:1 * H])
        f_g = jax.nn.sigmoid(gates[:, 1 * H:2 * H])
        g_g = jnp.tanh(gates[:, 2 * H:3 * H])
        o_g = jax.nn.sigmoid(gates[:, 3 * H:4 * H])
        c = f_g * c + i_g * g_g
        h = o_g * jnp.tanh(c)
        return (h, c), None

    h0 = jnp.zeros((B, H), jnp.float32)
    c0 = jnp.zeros((B, H), jnp.float32)
    (h, _), _ = jax.lax.scan(step, (h0, c0), jnp.transpose(x, (1, 0, 2)))
    return jnp.dot(h, w_fc.T, precision=hi) + b_fc


def init_params(key, input_size, hidden_size, output_size):
    """Deterministic init mimicking PyTorch's U(-1/sqrt(H), 1/sqrt(H))."""
    ks = jax.random.split(key, 6)
    k = 1.0 / jnp.sqrt(jnp.float32(hidden_size))
    u = lambda kk, shape: jax.random.uniform(kk, shape, jnp.float32, -k, k)
    return {
        "w_ih": u(ks[0], (4 * hidden_size, input_size)),
        "w_hh": u(ks[1], (4 * hidden_size, hidden_size)),
        "b_ih": u(ks[2], (4 * hidden_size,)),
        "b_hh": u(ks[3], (4 * hidden_size,)),
        "w_fc": u(ks[4], (output_size, hidden_size)),
        "b_fc": u(ks[5], (output_size,)),
    }


if __name__ == "__main__":
    B, T, INPUT, HIDDEN, OUT = 2, 8, 16, 32, 4

    root = jax.random.PRNGKey(0)
    k_x, k_p = jax.random.split(root)
    x = jax.random.normal(k_x, (B, T, INPUT), jnp.float32)
    params = init_params(k_p, INPUT, HIDDEN, OUT)

    out = jax.block_until_ready(jax.jit(lstm_model_forward)(x, params))
    ref = jax.block_until_ready(lstm_model_reference(x, params))

    assert out.shape == (B, OUT)
    assert jnp.allclose(out, ref, atol=1e-5, rtol=1e-5), (
        f"mismatch: max abs err {jnp.max(jnp.abs(out - ref))}")

    print("KERNEL_OK")
</pallas_src>

<mosaic_0001>
module attributes {stable_mosaic.version = 11 : i64} {
  func.func @_lstm_fc_kernel(%arg0: i32, %arg1: memref<8x8x512xf32, #tpu.memory_space<vmem>>, %arg2: memref<128x512xf32, #tpu.memory_space<vmem>>, %arg3: memref<128x128xf32, #tpu.memory_space<vmem>>, %arg4: memref<1x128xf32, #tpu.memory_space<vmem>>, %arg5: memref<8x128xf32, #tpu.memory_space<vmem>>, %arg6: memref<8x128xf32, #tpu.memory_space<vmem>>, %arg7: memref<8x128xf32, #tpu.memory_space<vmem>>) attributes {dimension_semantics = [#tpu.dimension_semantics<arbitrary>], iteration_bounds = array<i64: 1>, scalar_prefetch = 0 : i64, scratch_operands = 2 : i64, tpu.core_type = #tpu.core_type<tc>, window_params = [{transform_indices = @transform_0, window_bounds = array<i64: 8, 8, 512>}, {pipeline_mode = #tpu.pipeline_mode<synchronous>, transform_indices = @transform_1, window_bounds = array<i64: 128, 512>}, {pipeline_mode = #tpu.pipeline_mode<synchronous>, transform_indices = @transform_2, window_bounds = array<i64: 128, 128>}, {pipeline_mode = #tpu.pipeline_mode<synchronous>, transform_indices = @transform_3, window_bounds = array<i64: 1, 128>}, {pipeline_mode = #tpu.pipeline_mode<synchronous>, transform_indices = @transform_4, window_bounds = array<i64: 8, 128>}]} {
    %c0_i32 = arith.constant 0 : i32
    %0 = arith.cmpi eq, %arg0, %c0_i32 : i32
    %1 = arith.extui %0 : i1 to i32
    %c0_i32_0 = arith.constant 0 : i32
    %2 = arith.cmpi ne, %1, %c0_i32_0 : i32
    scf.if %2 {
      %cst_60 = arith.constant 0.000000e+00 : f32
      %251 = vector.broadcast %cst_60 : f32 to vector<8x128xf32>
      %c0_61 = arith.constant 0 : index
      %c0_62 = arith.constant 0 : index
      %252 = vector.load %arg6[%c0_61, %c0_62] : memref<8x128xf32, #tpu.memory_space<vmem>>, vector<8x128xf32>
      tpu.vector_store %arg6[%c0_61, %c0_62], %251 {strides = array<i32>} : memref<8x128xf32, #tpu.memory_space<vmem>>, vector<8x128xf32>,
      %cst_63 = arith.constant 0.000000e+00 : f32
      %253 = vector.broadcast %cst_63 : f32 to vector<8x128xf32>
      %c0_64 = arith.constant 0 : index
      %c0_65 = arith.constant 0 : index
      %254 = vector.load %arg7[%c0_64, %c0_65] : memref<8x128xf32, #tpu.memory_space<vmem>>, vector<8x128xf32>
      tpu.vector_store %arg7[%c0_64, %c0_65], %253 {strides = array<i32>} : memref<8x128xf32, #tpu.memory_space<vmem>>, vector<8x128xf32>,
    } else {
    }
    %c0 = arith.constant 0 : index
    %c0_1 = arith.constant 0 : index
    %3 = vector.load %arg2[%c0, %c0_1] : memref<128x512xf32, #tpu.memory_space<vmem>>, vector<128x512xf32>
    %c0_2 = arith.constant 0 : index
    %c0_3 = arith.constant 0 : index
    %4 = vector.load %arg6[%c0_2, %c0_3] : memref<8x128xf32, #tpu.memory_space<vmem>>, vector<8x128xf32>
    %c0_4 = arith.constant 0 : index
    %c0_5 = arith.constant 0 : index
    %5 = vector.load %arg7[%c0_4, %c0_5] : memref<8x128xf32, #tpu.memory_space<vmem>>, vector<8x128xf32>
    %c0_i32_6 = arith.constant 0 : i32
    %6 = arith.index_cast %c0_i32_6 : i32 to index
    %c0_7 = arith.constant 0 : index
    %c0_8 = arith.constant 0 : index
    %7 = vector.load %arg1[%6, %c0_7, %c0_8] : memref<8x8x512xf32, #tpu.memory_space<vmem>>, vector<1x8x512xf32>
    %8 = vector.shape_cast %7 : vector<1x8x512xf32> to vector<8x512xf32>
    %cst = arith.constant dense<0.000000e+00> : vector<8x512xf32>
    %9 = tpu.matmul %4, %3, %cst {dimension_numbers = #tpu.dot_dimension_numbers<[1], [0], [0], [1], [0, 0, 1, 1], [], []>} : vector<8x128xf32>, vector<128x512xf32>, vector<8x512xf32> -> vector<8x512xf32>
    %10 = arith.addf %8, %9 : vector<8x512xf32>
    %11 = vector.extract_strided_slice %10 {offsets = [0, 0], sizes = [8, 128], strides = [1, 1]} : vector<8x512xf32> to vector<8x128xf32>
    %12 = arith.negf %11 : vector<8x128xf32>
    %13 = math.exp %12 : vector<8x128xf32>
    %cst_9 = arith.constant 1.000000e+00 : f32
    %14 = vector.broadcast %cst_9 : f32 to vector<8x128xf32>
    %15 = arith.addf %14, %13 : vector<8x128xf32>
    %16 = arith.divf %14, %15 : vector<8x128xf32>
    %17 = vector.extract_strided_slice %10 {offsets = [0, 128], sizes = [8, 128], strides = [1, 1]} : vector<8x512xf32> to vector<8x128xf32>
    %18 = arith.negf %17 : vector<8x128xf32>
    %19 = math.exp %18 : vector<8x128xf32>
    %cst_10 = arith.constant 1.000000e+00 : f32
    %20 = vector.broadcast %cst_10 : f32 to vector<8x128xf32>
    %21 = arith.addf %20, %19 : vector<8x128xf32>
    %22 = arith.divf %20, %21 : vector<8x128xf32>
    %23 = vector.extract_strided_slice %10 {offsets = [0, 256], sizes = [8, 128], strides = [1, 1]} : vector<8x512xf32> to vector<8x128xf32>
    %24 = math.tanh %23 : vector<8x128xf32>
    %25 = vector.extract_strided_slice %10 {offsets = [0, 384], sizes = [8, 128], strides = [1, 1]} : vector<8x512xf32> to vector<8x128xf32>
    %26 = arith.negf %25 : vector<8x128xf32>
    %27 = math.exp %26 : vector<8x128xf32>
    %cst_11 = arith.constant 1.000000e+00 : f32
    %28 = vector.broadcast %cst_11 : f32 to vector<8x128xf32>
    %29 = arith.addf %28, %27 : vector<8x128xf32>
    %30 = arith.divf %28, %29 : vector<8x128xf32>
    %31 = arith.mulf %22, %5 : vector<8x128xf32>
    %32 = arith.mulf %16, %24 : vector<8x128xf32>
    %33 = arith.addf %31, %32 : vector<8x128xf32>
    %34 = math.tanh %33 : vector<8x128xf32>
    %35 = arith.mulf %30, %34 : vector<8x128xf32>
    %c1_i32 = arith.constant 1 : i32
    %36 = arith.index_cast %c1_i32 : i32 to index
    %c0_12 = arith.constant 0 : index
    %c0_13 = arith.constant 0 : index
    %37 = vector.load %arg1[%36, %c0_12, %c0_13] : memref<8x8x512xf32, #tpu.memory_space<vmem>>, vector<1x8x512xf32>
    %38 = vector.shape_cast %37 : vector<1x8x512xf32> to vector<8x512xf32>
    %cst_14 = arith.constant dense<0.000000e+00> : vector<8x512xf32>
    %39 = tpu.matmul %35, %3, %cst_14 {dimension_numbers = #tpu.dot_dimension_numbers<[1], [0], [0], [1], [0, 0, 1, 1], [], []>} : vector<8x128xf32>, vector<128x512xf32>, vector<8x512xf32> -> vector<8x512xf32>
    %40 = arith.addf %38, %39 : vector<8x512xf32>
    %41 = vector.extract_strided_slice %40 {offsets = [0, 0], sizes = [8, 128], strides = [1, 1]} : vector<8x512xf32> to vector<8x128xf32>
    %42 = arith.negf %41 : vector<8x128xf32>
    %43 = math.exp %42 : vector<8x128xf32>
    %cst_15 = arith.constant 1.000000e+00 : f32
    %44 = vector.broadcast %cst_15 : f32 to vector<8x128xf32>
    %45 = arith.addf %44, %43 : vector<8x128xf32>
    %46 = arith.divf %44, %45 : vector<8x128xf32>
    %47 = vector.extract_strided_slice %40 {offsets = [0, 128], sizes = [8, 128], strides = [1, 1]} : vector<8x512xf32> to vector<8x128xf32>
    %48 = arith.negf %47 : vector<8x128xf32>
    %49 = math.exp %48 : vector<8x128xf32>
    %cst_16 = arith.constant 1.000000e+00 : f32
    %50 = vector.broadcast %cst_16 : f32 to vector<8x128xf32>
    %51 = arith.addf %50, %49 : vector<8x128xf32>
    %52 = arith.divf %50, %51 : vector<8x128xf32>
    %53 = vector.extract_strided_slice %40 {offsets = [0, 256], sizes = [8, 128], strides = [1, 1]} : vector<8x512xf32> to vector<8x128xf32>
    %54 = math.tanh %53 : vector<8x128xf32>
    %55 = vector.extract_strided_slice %40 {offsets = [0, 384], sizes = [8, 128], strides = [1, 1]} : vector<8x512xf32> to vector<8x128xf32>
    %56 = arith.negf %55 : vector<8x128xf32>
    %57 = math.exp %56 : vector<8x128xf32>
    %cst_17 = arith.constant 1.000000e+00 : f32
    %58 = vector.broadcast %cst_17 : f32 to vector<8x128xf32>
    %59 = arith.addf %58, %57 : vector<8x128xf32>
    %60 = arith.divf %58, %59 : vector<8x128xf32>
    %61 = arith.mulf %52, %33 : vector<8x128xf32>
    %62 = arith.mulf %46, %54 : vector<8x128xf32>
    %63 = arith.addf %61, %62 : vector<8x128xf32>
    %64 = math.tanh %63 : vector<8x128xf32>
    %65 = arith.mulf %60, %64 : vector<8x128xf32>
    %c2_i32 = arith.constant 2 : i32
    %66 = arith.index_cast %c2_i32 : i32 to index
    %c0_18 = arith.constant 0 : index
    %c0_19 = arith.constant 0 : index
    %67 = vector.load %arg1[%66, %c0_18, %c0_19] : memref<8x8x512xf32, #tpu.memory_space<vmem>>, vector<1x8x512xf32>
    %68 = vector.shape_cast %67 : vector<1x8x512xf32> to vector<8x512xf32>
    %cst_20 = arith.constant dense<0.000000e+00> : vector<8x512xf32>
    %69 = tpu.matmul %65, %3, %cst_20 {dimension_numbers = #tpu.dot_dimension_numbers<[1], [0], [0], [1], [0, 0, 1, 1], [], []>} : vector<8x128xf32>, vector<128x512xf32>, vector<8x512xf32> -> vector<8x512xf32>
    %70 = arith.addf %68, %69 : vector<8x512xf32>
    %71 = vector.extract_strided_slice %70 {offsets = [0, 0], sizes = [8, 128], strides = [1, 1]} : vector<8x512xf32> to vector<8x128xf32>
    %72 = arith.negf %71 : vector<8x128xf32>
    %73 = math.exp %72 : vector<8x128xf32>
    %cst_21 = arith.constant 1.000000e+00 : f32
    %74 = vector.broadcast %cst_21 : f32 to vector<8x128xf32>
    %75 = arith.addf %74, %73 : vector<8x128xf32>
    %76 = arith.divf %74, %75 : vector<8x128xf32>
    %77 = vector.extract_strided_slice %70 {offsets = [0, 128], sizes = [8, 128], strides = [1, 1]} : vector<8x512xf32> to vector<8x128xf32>
    %78 = arith.negf %77 : vector<8x128xf32>
    %79 = math.exp %78 : vector<8x128xf32>
    %cst_22 = arith.constant 1.000000e+00 : f32
    %80 = vector.broadcast %cst_22 : f32 to vector<8x128xf32>
    %81 = arith.addf %80, %79 : vector<8x128xf32>
    %82 = arith.divf %80, %81 : vector<8x128xf32>
    %83 = vector.extract_strided_slice %70 {offsets = [0, 256], sizes = [8, 128], strides = [1, 1]} : vector<8x512xf32> to vector<8x128xf32>
    %84 = math.tanh %83 : vector<8x128xf32>
    %85 = vector.extract_strided_slice %70 {offsets = [0, 384], sizes = [8, 128], strides = [1, 1]} : vector<8x512xf32> to vector<8x128xf32>
    %86 = arith.negf %85 : vector<8x128xf32>
    %87 = math.exp %86 : vector<8x128xf32>
    %cst_23 = arith.constant 1.000000e+00 : f32
    %88 = vector.broadcast %cst_23 : f32 to vector<8x128xf32>
    %89 = arith.addf %88, %87 : vector<8x128xf32>
    %90 = arith.divf %88, %89 : vector<8x128xf32>
    %91 = arith.mulf %82, %63 : vector<8x128xf32>
    %92 = arith.mulf %76, %84 : vector<8x128xf32>
    %93 = arith.addf %91, %92 : vector<8x128xf32>
    %94 = math.tanh %93 : vector<8x128xf32>
    %95 = arith.mulf %90, %94 : vector<8x128xf32>
    %c3_i32 = arith.constant 3 : i32
    %96 = arith.index_cast %c3_i32 : i32 to index
    %c0_24 = arith.constant 0 : index
    %c0_25 = arith.constant 0 : index
    %97 = vector.load %arg1[%96, %c0_24, %c0_25] : memref<8x8x512xf32, #tpu.memory_space<vmem>>, vector<1x8x512xf32>
    %98 = vector.shape_cast %97 : vector<1x8x512xf32> to vector<8x512xf32>
    %cst_26 = arith.constant dense<0.000000e+00> : vector<8x512xf32>
    %99 = tpu.matmul %95, %3, %cst_26 {dimension_numbers = #tpu.dot_dimension_numbers<[1], [0], [0], [1], [0, 0, 1, 1], [], []>} : vector<8x128xf32>, vector<128x512xf32>, vector<8x512xf32> -> vector<8x512xf32>
    %100 = arith.addf %98, %99 : vector<8x512xf32>
    %101 = vector.extract_strided_slice %100 {offsets = [0, 0], sizes = [8, 128], strides = [1, 1]} : vector<8x512xf32> to vector<8x128xf32>
    %102 = arith.negf %101 : vector<8x128xf32>
    %103 = math.exp %102 : vector<8x128xf32>
    %cst_27 = arith.constant 1.000000e+00 : f32
    %104 = vector.broadcast %cst_27 : f32 to vector<8x128xf32>
    %105 = arith.addf %104, %103 : vector<8x128xf32>
    %106 = arith.divf %104, %105 : vector<8x128xf32>
    %107 = vector.extract_strided_slice %100 {offsets = [0, 128], sizes = [8, 128], strides = [1, 1]} : vector<8x512xf32> to vector<8x128xf32>
    %108 = arith.negf %107 : vector<8x128xf32>
    %109 = math.exp %108 : vector<8x128xf32>
    %cst_28 = arith.constant 1.000000e+00 : f32
    %110 = vector.broadcast %cst_28 : f32 to vector<8x128xf32>
    %111 = arith.addf %110, %109 : vector<8x128xf32>
    %112 = arith.divf %110, %111 : vector<8x128xf32>
    %113 = vector.extract_strided_slice %100 {offsets = [0, 256], sizes = [8, 128], strides = [1, 1]} : vector<8x512xf32> to vector<8x128xf32>
    %114 = math.tanh %113 : vector<8x128xf32>
    %115 = vector.extract_strided_slice %100 {offsets = [0, 384], sizes = [8, 128], strides = [1, 1]} : vector<8x512xf32> to vector<8x128xf32>
    %116 = arith.negf %115 : vector<8x128xf32>
    %117 = math.exp %116 : vector<8x128xf32>
    %cst_29 = arith.constant 1.000000e+00 : f32
    %118 = vector.broadcast %cst_29 : f32 to vector<8x128xf32>
    %119 = arith.addf %118, %117 : vector<8x128xf32>
    %120 = arith.divf %118, %119 : vector<8x128xf32>
    %121 = arith.mulf %112, %93 : vector<8x128xf32>
    %122 = arith.mulf %106, %114 : vector<8x128xf32>
    %123 = arith.addf %121, %122 : vector<8x128xf32>
    %124 = math.tanh %123 : vector<8x128xf32>
    %125 = arith.mulf %120, %124 : vector<8x128xf32>
    %c4_i32 = arith.constant 4 : i32
    %126 = arith.index_cast %c4_i32 : i32 to index
    %c0_30 = arith.constant 0 : index
    %c0_31 = arith.constant 0 : index
    %127 = vector.load %arg1[%126, %c0_30, %c0_31] : memref<8x8x512xf32, #tpu.memory_space<vmem>>, vector<1x8x512xf32>
    %128 = vector.shape_cast %127 : vector<1x8x512xf32> to vector<8x512xf32>
    %cst_32 = arith.constant dense<0.000000e+00> : vector<8x512xf32>
    %129 = tpu.matmul %125, %3, %cst_32 {dimension_numbers = #tpu.dot_dimension_numbers<[1], [0], [0], [1], [0, 0, 1, 1], [], []>} : vector<8x128xf32>, vector<128x512xf32>, vector<8x512xf32> -> vector<8x512xf32>
    %130 = arith.addf %128, %129 : vector<8x512xf32>
    %131 = vector.extract_strided_slice %130 {offsets = [0, 0], sizes = [8, 128], strides = [1, 1]} : vector<8x512xf32> to vector<8x128xf32>
    %132 = arith.negf %131 : vector<8x128xf32>
    %133 = math.exp %132 : vector<8x128xf32>
    %cst_33 = arith.constant 1.000000e+00 : f32
    %134 = vector.broadcast %cst_33 : f32 to vector<8x128xf32>
    %135 = arith.addf %134, %133 : vector<8x128xf32>
    %136 = arith.divf %134, %135 : vector<8x128xf32>
    %137 = vector.extract_strided_slice %130 {offsets = [0, 128], sizes = [8, 128], strides = [1, 1]} : vector<8x512xf32> to vector<8x128xf32>
    %138 = arith.negf %137 : vector<8x128xf32>
    %139 = math.exp %138 : vector<8x128xf32>
    %cst_34 = arith.constant 1.000000e+00 : f32
    %140 = vector.broadcast %cst_34 : f32 to vector<8x128xf32>
    %141 = arith.addf %140, %139 : vector<8x128xf32>
    %142 = arith.divf %140, %141 : vector<8x128xf32>
    %143 = vector.extract_strided_slice %130 {offsets = [0, 256], sizes = [8, 128], strides = [1, 1]} : vector<8x512xf32> to vector<8x128xf32>
    %144 = math.tanh %143 : vector<8x128xf32>
    %145 = vector.extract_strided_slice %130 {offsets = [0, 384], sizes = [8, 128], strides = [1, 1]} : vector<8x512xf32> to vector<8x128xf32>
    %146 = arith.negf %145 : vector<8x128xf32>
    %147 = math.exp %146 : vector<8x128xf32>
    %cst_35 = arith.constant 1.000000e+00 : f32
    %148 = vector.broadcast %cst_35 : f32 to vector<8x128xf32>
    %149 = arith.addf %148, %147 : vector<8x128xf32>
    %150 = arith.divf %148, %149 : vector<8x128xf32>
    %151 = arith.mulf %142, %123 : vector<8x128xf32>
    %152 = arith.mulf %136, %144 : vector<8x128xf32>
    %153 = arith.addf %151, %152 : vector<8x128xf32>
    %154 = math.tanh %153 : vector<8x128xf32>
    %155 = arith.mulf %150, %154 : vector<8x128xf32>
    %c5_i32 = arith.constant 5 : i32
    %156 = arith.index_cast %c5_i32 : i32 to index
    %c0_36 = arith.constant 0 : index
    %c0_37 = arith.constant 0 : index
    %157 = vector.load %arg1[%156, %c0_36, %c0_37] : memref<8x8x512xf32, #tpu.memory_space<vmem>>, vector<1x8x512xf32>
    %158 = vector.shape_cast %157 : vector<1x8x512xf32> to vector<8x512xf32>
    %cst_38 = arith.constant dense<0.000000e+00> : vector<8x512xf32>
    %159 = tpu.matmul %155, %3, %cst_38 {dimension_numbers = #tpu.dot_dimension_numbers<[1], [0], [0], [1], [0, 0, 1, 1], [], []>} : vector<8x128xf32>, vector<128x512xf32>, vector<8x512xf32> -> vector<8x512xf32>
    %160 = arith.addf %158, %159 : vector<8x512xf32>
    %161 = vector.extract_strided_slice %160 {offsets = [0, 0], sizes = [8, 128], strides = [1, 1]} : vector<8x512xf32> to vector<8x128xf32>
    %162 = arith.negf %161 : vector<8x128xf32>
    %163 = math.exp %162 : vector<8x128xf32>
    %cst_39 = arith.constant 1.000000e+00 : f32
    %164 = vector.broadcast %cst_39 : f32 to vector<8x128xf32>
    %165 = arith.addf %164, %163 : vector<8x128xf32>
    %166 = arith.divf %164, %165 : vector<8x128xf32>
    %167 = vector.extract_strided_slice %160 {offsets = [0, 128], sizes = [8, 128], strides = [1, 1]} : vector<8x512xf32> to vector<8x128xf32>
    %168 = arith.negf %167 : vector<8x128xf32>
    %169 = math.exp %168 : vector<8x128xf32>
    %cst_40 = arith.constant 1.000000e+00 : f32
    %170 = vector.broadcast %cst_40 : f32 to vector<8x128xf32>
    %171 = arith.addf %170, %169 : vector<8x128xf32>
    %172 = arith.divf %170, %171 : vector<8x128xf32>
    %173 = vector.extract_strided_slice %160 {offsets = [0, 256], sizes = [8, 128], strides = [1, 1]} : vector<8x512xf32> to vector<8x128xf32>
    %174 = math.tanh %173 : vector<8x128xf32>
    %175 = vector.extract_strided_slice %160 {offsets = [0, 384], sizes = [8, 128], strides = [1, 1]} : vector<8x512xf32> to vector<8x128xf32>
    %176 = arith.negf %175 : vector<8x128xf32>
    %177 = math.exp %176 : vector<8x128xf32>
    %cst_41 = arith.constant 1.000000e+00 : f32
    %178 = vector.broadcast %cst_41 : f32 to vector<8x128xf32>
    %179 = arith.addf %178, %177 : vector<8x128xf32>
    %180 = arith.divf %178, %179 : vector<8x128xf32>
    %181 = arith.mulf %172, %153 : vector<8x128xf32>
    %182 = arith.mulf %166, %174 : vector<8x128xf32>
    %183 = arith.addf %181, %182 : vector<8x128xf32>
    %184 = math.tanh %183 : vector<8x128xf32>
    %185 = arith.mulf %180, %184 : vector<8x128xf32>
    %c6_i32 = arith.constant 6 : i32
    %186 = arith.index_cast %c6_i32 : i32 to index
    %c0_42 = arith.constant 0 : index
    %c0_43 = arith.constant 0 : index
    %187 = vector.load %arg1[%186, %c0_42, %c0_43] : memref<8x8x512xf32, #tpu.memory_space<vmem>>, vector<1x8x512xf32>
    %188 = vector.shape_cast %187 : vector<1x8x512xf32> to vector<8x512xf32>
    %cst_44 = arith.constant dense<0.000000e+00> : vector<8x512xf32>
    %189 = tpu.matmul %185, %3, %cst_44 {dimension_numbers = #tpu.dot_dimension_numbers<[1], [0], [0], [1], [0, 0, 1, 1], [], []>} : vector<8x128xf32>, vector<128x512xf32>, vector<8x512xf32> -> vector<8x512xf32>
    %190 = arith.addf %188, %189 : vector<8x512xf32>
    %191 = vector.extract_strided_slice %190 {offsets = [0, 0], sizes = [8, 128], strides = [1, 1]} : vector<8x512xf32> to vector<8x128xf32>
    %192 = arith.negf %191 : vector<8x128xf32>
    %193 = math.exp %192 : vector<8x128xf32>
    %cst_45 = arith.constant 1.000000e+00 : f32
    %194 = vector.broadcast %cst_45 : f32 to vector<8x128xf32>
    %195 = arith.addf %194, %193 : vector<8x128xf32>
    %196 = arith.divf %194, %195 : vector<8x128xf32>
    %197 = vector.extract_strided_slice %190 {offsets = [0, 128], sizes = [8, 128], strides = [1, 1]} : vector<8x512xf32> to vector<8x128xf32>
    %198 = arith.negf %197 : vector<8x128xf32>
    %199 = math.exp %198 : vector<8x128xf32>
    %cst_46 = arith.constant 1.000000e+00 : f32
    %200 = vector.broadcast %cst_46 : f32 to vector<8x128xf32>
    %201 = arith.addf %200, %199 : vector<8x128xf32>
    %202 = arith.divf %200, %201 : vector<8x128xf32>
    %203 = vector.extract_strided_slice %190 {offsets = [0, 256], sizes = [8, 128], strides = [1, 1]} : vector<8x512xf32> to vector<8x128xf32>
    %204 = math.tanh %203 : vector<8x128xf32>
    %205 = vector.extract_strided_slice %190 {offsets = [0, 384], sizes = [8, 128], strides = [1, 1]} : vector<8x512xf32> to vector<8x128xf32>
    %206 = arith.negf %205 : vector<8x128xf32>
    %207 = math.exp %206 : vector<8x128xf32>
    %cst_47 = arith.constant 1.000000e+00 : f32
    %208 = vector.broadcast %cst_47 : f32 to vector<8x128xf32>
    %209 = arith.addf %208, %207 : vector<8x128xf32>
    %210 = arith.divf %208, %209 : vector<8x128xf32>
    %211 = arith.mulf %202, %183 : vector<8x128xf32>
    %212 = arith.mulf %196, %204 : vector<8x128xf32>
    %213 = arith.addf %211, %212 : vector<8x128xf32>
    %214 = math.tanh %213 : vector<8x128xf32>
    %215 = arith.mulf %210, %214 : vector<8x128xf32>
    %c7_i32 = arith.constant 7 : i32
    %216 = arith.index_cast %c7_i32 : i32 to index
    %c0_48 = arith.constant 0 : index
    %c0_49 = arith.constant 0 : index
    %217 = vector.load %arg1[%216, %c0_48, %c0_49] : memref<8x8x512xf32, #tpu.memory_space<vmem>>, vector<1x8x512xf32>
    %218 = vector.shape_cast %217 : vector<1x8x512xf32> to vector<8x512xf32>
    %cst_50 = arith.constant dense<0.000000e+00> : vector<8x512xf32>
    %219 = tpu.matmul %215, %3, %cst_50 {dimension_numbers = #tpu.dot_dimension_numbers<[1], [0], [0], [1], [0, 0, 1, 1], [], []>} : vector<8x128xf32>, vector<128x512xf32>, vector<8x512xf32> -> vector<8x512xf32>
    %220 = arith.addf %218, %219 : vector<8x512xf32>
    %221 = vector.extract_strided_slice %220 {offsets = [0, 0], sizes = [8, 128], strides = [1, 1]} : vector<8x512xf32> to vector<8x128xf32>
    %222 = arith.negf %221 : vector<8x128xf32>
    %223 = math.exp %222 : vector<8x128xf32>
    %cst_51 = arith.constant 1.000000e+00 : f32
    %224 = vector.broadcast %cst_51 : f32 to vector<8x128xf32>
    %225 = arith.addf %224, %223 : vector<8x128xf32>
    %226 = arith.divf %224, %225 : vector<8x128xf32>
    %227 = vector.extract_strided_slice %220 {offsets = [0, 128], sizes = [8, 128], strides = [1, 1]} : vector<8x512xf32> to vector<8x128xf32>
    %228 = arith.negf %227 : vector<8x128xf32>
    %229 = math.exp %228 : vector<8x128xf32>
    %cst_52 = arith.constant 1.000000e+00 : f32
    %230 = vector.broadcast %cst_52 : f32 to vector<8x128xf32>
    %231 = arith.addf %230, %229 : vector<8x128xf32>
    %232 = arith.divf %230, %231 : vector<8x128xf32>
    %233 = vector.extract_strided_slice %220 {offsets = [0, 256], sizes = [8, 128], strides = [1, 1]} : vector<8x512xf32> to vector<8x128xf32>
    %234 = math.tanh %233 : vector<8x128xf32>
    %235 = vector.extract_strided_slice %220 {offsets = [0, 384], sizes = [8, 128], strides = [1, 1]} : vector<8x512xf32> to vector<8x128xf32>
    %236 = arith.negf %235 : vector<8x128xf32>
    %237 = math.exp %236 : vector<8x128xf32>
    %cst_53 = arith.constant 1.000000e+00 : f32
    %238 = vector.broadcast %cst_53 : f32 to vector<8x128xf32>
    %239 = arith.addf %238, %237 : vector<8x128xf32>
    %240 = arith.divf %238, %239 : vector<8x128xf32>
    %241 = arith.mulf %232, %213 : vector<8x128xf32>
    %242 = arith.mulf %226, %234 : vector<8x128xf32>
    %243 = arith.addf %241, %242 : vector<8x128xf32>
    %244 = math.tanh %243 : vector<8x128xf32>
    %245 = arith.mulf %240, %244 : vector<8x128xf32>
    %c8_i32 = arith.constant 8 : i32
    %c0_54 = arith.constant 0 : index
    %c0_55 = arith.constant 0 : index
    %246 = vector.load %arg6[%c0_54, %c0_55] : memref<8x128xf32, #tpu.memory_space<vmem>>, vector<8x128xf32>
    tpu.vector_store %arg6[%c0_54, %c0_55], %245 {strides = array<i32>} : memref<8x128xf32, #tpu.memory_space<vmem>>, vector<8x128xf32>,
    %c0_56 = arith.constant 0 : index
    %c0_57 = arith.constant 0 : index
    %247 = vector.load %arg7[%c0_56, %c0_57] : memref<8x128xf32, #tpu.memory_space<vmem>>, vector<8x128xf32>
    tpu.vector_store %arg7[%c0_56, %c0_57], %243 {strides = array<i32>} : memref<8x128xf32, #tpu.memory_space<vmem>>, vector<8x128xf32>,
    %c0_i32_58 = arith.constant 0 : i32
    %248 = arith.cmpi eq, %arg0, %c0_i32_58 : i32
    %249 = arith.extui %248 : i1 to i32
    %c0_i32_59 = arith.constant 0 : i32
    %250 = arith.cmpi ne, %249, %c0_i32_59 : i32
    scf.if %250 {
      %c0_60 = arith.constant 0 : index
      %c0_61 = arith.constant 0 : index
      %251 = vector.load %arg3[%c0_60, %c0_61] : memref<128x128xf32, #tpu.memory_space<vmem>>, vector<128x128xf32>
      %cst_62 = arith.constant dense<0.000000e+00> : vector<8x128xf32>
      %252 = tpu.matmul %245, %251, %cst_62 {dimension_numbers = #tpu.dot_dimension_numbers<[1], [0], [0], [1], [0, 0, 1, 1], [], []>} : vector<8x128xf32>, vector<128x128xf32>, vector<8x128xf32> -> vector<8x128xf32>
      %c0_63 = arith.constant 0 : index
      %c0_64 = arith.constant 0 : index
      %253 = vector.load %arg4[%c0_63, %c0_64] : memref<1x128xf32, #tpu.memory_space<vmem>>, vector<1x128xf32>
      %254 = vector.broadcast %253 : vector<1x128xf32> to vector<8x128xf32>
      %255 = arith.addf %252, %254 : vector<8x128xf32>
      %c0_65 = arith.constant 0 : index
      %c0_66 = arith.constant 0 : index
      %256 = vector.load %arg5[%c0_65, %c0_66] : memref<8x128xf32, #tpu.memory_space<vmem>>, vector<8x128xf32>
      tpu.vector_store %arg5[%c0_65, %c0_66], %255 {strides = array<i32>} : memref<8x128xf32, #tpu.memory_space<vmem>>, vector<8x128xf32>,
    } else {
    }
    return
  }
  func.func @transform_0(%arg0: i32) -> (i32, i32, i32) {
    %c0_i32 = arith.constant 0 : i32
    %c0_i32_0 = arith.constant 0 : i32
    %c0_i32_1 = arith.constant 0 : i32
    return %arg0, %c0_i32, %c0_i32_0 : i32, i32, i32
  }
  func.func @transform_1(%arg0: i32) -> (i32, i32) {
    %c0_i32 = arith.constant 0 : i32
    %c0_i32_0 = arith.constant 0 : i32
    %c0_i32_1 = arith.constant 0 : i32
    return %c0_i32, %c0_i32_0 : i32, i32
  }
  func.func @transform_2(%arg0: i32) -> (i32, i32) {
    %c0_i32 = arith.constant 0 : i32
    %c0_i32_0 = arith.constant 0 : i32
    %c0_i32_1 = arith.constant 0 : i32
    return %c0_i32, %c0_i32_0 : i32, i32
  }
  func.func @transform_3(%arg0: i32) -> (i32, i32) {
    %c0_i32 = arith.constant 0 : i32
    %c0_i32_0 = arith.constant 0 : i32
    %c0_i32_1 = arith.constant 0 : i32
    return %c0_i32, %c0_i32_0 : i32, i32
  }
  func.func @transform_4(%arg0: i32) -> (i32, i32) {
    %c0_i32 = arith.constant 0 : i32
    %c0_i32_0 = arith.constant 0 : i32
    %c0_i32_1 = arith.constant 0 : i32
    return %c0_i32, %c0_i32_0 : i32, i32
  }
}

</mosaic_0001>

<llo_original>
// kernel: lstm_model_forward.1
$region0: #{lstm_model_forward.1}
  #allocation0 [shape = 'u32[]', space=smem, size = 0x4, offset = 0x4, fixed_abs, tag = 'smem constant byte address 0x4 - core index']
  #allocation1 [shape = 'u32[144,128]{1,0:T(1,128)}', space=vmem, size = 0x12000, scoped, tag = 'internal scratch']
  #allocation2 [shape = 'f32[8,128]{1,0:T(8,128)}', space=vmem, size = 0x1000, scoped, tag = 'scratch operand']
  #allocation3 [shape = 'f32[8,128]{1,0:T(8,128)}', space=vmem, size = 0x1000, scoped, tag = 'scratch operand']
  %s0 = inlined_call_operand.vmem [shape: f32[8,8,512], index: 0, kind: input, shape index: {}]
  %s1 = inlined_call_operand.vmem [shape: f32[128,512], index: 1, kind: input, shape index: {}]
  %s2 = inlined_call_operand.vmem [shape: f32[128,128], index: 2, kind: input, shape index: {}]
  %s3 = inlined_call_operand.vmem [shape: f32[1,128], index: 3, kind: input, shape index: {}]
  %s4 = inlined_call_operand.vmem [shape: f32[8,128], index: 4, kind: output, shape index: {}]
  %s5 = sld [smem:[#allocation0]]
  $region34: #{lstm_model_forward.1} parent=0
    _
  %s7 = ssub.s32 1, %s5
  %s8 = scalar_select 0, %s7, %s5
  // Predicated region
  $region2: #{lstm_model_forward.1} parent=0 // pred_check
    _
  $region3: #{lstm_model_forward.1} parent=0 // pred_check_branch
    %10 = sbr.rel (0) target = $region5
  $region4: #{lstm_model_forward.1} parent=0 // pred_region
    _
  $region5: #{lstm_model_forward.1} parent=0 // pred_fallthru
    _
  // Predicated region
  $region6: #{lstm_model_forward.1} parent=0 // pred_check
    _
  $region7: #{lstm_model_forward.1} parent=0 // pred_check_branch
    %12 = sbr.rel (0) target = $region9
  $region8: #{lstm_model_forward.1} parent=0 // pred_region
    _
  $region9: #{lstm_model_forward.1} parent=0 // pred_fallthru
    _
  // Predicated region
  $region10: #{lstm_model_forward.1} parent=0 // pred_check
    _
  $region11: #{lstm_model_forward.1} parent=0 // pred_check_branch
    %14 = sbr.rel (0) target = $region13
  $region12: #{lstm_model_forward.1} parent=0 // pred_region
    _
  $region13: #{lstm_model_forward.1} parent=0 // pred_fallthru
    _
  // Predicated region
  $region14: #{lstm_model_forward.1} parent=0 // pred_check
    _
  $region15: #{lstm_model_forward.1} parent=0 // pred_check_branch
    %16 = sbr.rel (0) target = $region17
  $region16: #{lstm_model_forward.1} parent=0 // pred_region
    _
  $region17: #{lstm_model_forward.1} parent=0 // pred_fallthru
    _
  %p17 = scmp.eq.s32.totalorder 0, 0
  // Predicated region
  $region18: #{lstm_model_forward.1} parent=0 // pred_check
    %p18 = pneg %p17
  $region19: #{lstm_model_forward.1} parent=0 // pred_check_branch
    %20 = sbr.rel (%p18) target = $region21
  $region20: #{lstm_model_forward.1} parent=0 // pred_region
    %21 = vst [vmem:[#allocation2] sm:$0xff] 0.0
    %22 = vst [vmem:[#allocation3] sm:$0xff] 0.0
  $region21: #{lstm_model_forward.1} parent=0 // pred_fallthru
    _
  %v23 = vld [vmem:[%s1] sm:$0xff]
  %v24 = vld [vmem:[%s1 + $0x8] sm:$0xff]
  %v25 = vld [vmem:[%s1 + $0x10] sm:$0xff]
  %v26 = vld [vmem:[%s1 + $0x18] sm:$0xff]
  %v27 = vld [vmem:[%s1 + $0x20] sm:$0xff]
  %v28 = vld [vmem:[%s1 + $0x28] sm:$0xff]
  %v29 = vld [vmem:[%s1 + $0x30] sm:$0xff]
  %v30 = vld [vmem:[%s1 + $0x38] sm:$0xff]
  %v31 = vld [vmem:[%s1 + $0x40] sm:$0xff]
  %v32 = vld [vmem:[%s1 + $0x48] sm:$0xff]
  %v33 = vld [vmem:[%s1 + $0x50] sm:$0xff]
  %v34 = vld [vmem:[%s1 + $0x58] sm:$0xff]
  %v35 = vld [vmem:[%s1 + $0x60] sm:$0xff]
  %v36 = vld [vmem:[%s1 + $0x68] sm:$0xff]
  %v37 = vld [vmem:[%s1 + $0x70] sm:$0xff]
  %v38 = vld [vmem:[%s1 + $0x78] sm:$0xff]
  %v39 = vld [vmem:[%s1 + $0x80] sm:$0xff]
  %v40 = vld [vmem:[%s1 + $0x88] sm:$0xff]
  %v41 = vld [vmem:[%s1 + $0x90] sm:$0xff]
  %v42 = vld [vmem:[%s1 + $0x98] sm:$0xff]
  %v43 = vld [vmem:[%s1 + $0xa0] sm:$0xff]
  %v44 = vld [vmem:[%s1 + $0xa8] sm:$0xff]
  %v45 = vld [vmem:[%s1 + $0xb0] sm:$0xff]
  %v46 = vld [vmem:[%s1 + $0xb8] sm:$0xff]
  %v47 = vld [vmem:[%s1 + $0xc0] sm:$0xff]
  %v48 = vld [vmem:[%s1 + $0xc8] sm:$0xff]
  %v49 = vld [vmem:[%s1 + $0xd0] sm:$0xff]
  %v50 = vld [vmem:[%s1 + $0xd8] sm:$0xff]
  %v51 = vld [vmem:[%s1 + $0xe0] sm:$0xff]
  %v52 = vld [vmem:[%s1 + $0xe8] sm:$0xff]
  %v53 = vld [vmem:[%s1 + $0xf0] sm:$0xff]
  %v54 = vld [vmem:[%s1 + $0xf8] sm:$0xff]
  %v55 = vld [vmem:[%s1 + $0x100] sm:$0xff]
  %v56 = vld [vmem:[%s1 + $0x108] sm:$0xff]
  %v57 = vld [vmem:[%s1 + $0x110] sm:$0xff]
  %v58 = vld [vmem:[%s1 + $0x118] sm:$0xff]
  %v59 = vld [vmem:[%s1 + $0x120] sm:$0xff]
  %v60 = vld [vmem:[%s1 + $0x128] sm:$0xff]
  %v61 = vld [vmem:[%s1 + $0x130] sm:$0xff]
  %v62 = vld [vmem:[%s1 + $0x138] sm:$0xff]
  %v63 = vld [vmem:[%s1 + $0x140] sm:$0xff]
  %v64 = vld [vmem:[%s1 + $0x148] sm:$0xff]
  %v65 = vld [vmem:[%s1 + $0x150] sm:$0xff]
  %v66 = vld [vmem:[%s1 + $0x158] sm:$0xff]
  %v67 = vld [vmem:[%s1 + $0x160] sm:$0xff]
  %v68 = vld [vmem:[%s1 + $0x168] sm:$0xff]
  %v69 = vld [vmem:[%s1 + $0x170] sm:$0xff]
  %v70 = vld [vmem:[%s1 + $0x178] sm:$0xff]
  %v71 = vld [vmem:[%s1 + $0x180] sm:$0xff]
  %v72 = vld [vmem:[%s1 + $0x188] sm:$0xff]
  %v73 = vld [vmem:[%s1 + $0x190] sm:$0xff]
  %v74 = vld [vmem:[%s1 + $0x198] sm:$0xff]
  %v75 = vld [vmem:[%s1 + $0x1a0] sm:$0xff]
  %v76 = vld [vmem:[%s1 + $0x1a8] sm:$0xff]
  %v77 = vld [vmem:[%s1 + $0x1b0] sm:$0xff]
  %v78 = vld [vmem:[%s1 + $0x1b8] sm:$0xff]
  %v79 = vld [vmem:[%s1 + $0x1c0] sm:$0xff]
  %v80 = vld [vmem:[%s1 + $0x1c8] sm:$0xff]
  %v81 = vld [vmem:[%s1 + $0x1d0] sm:$0xff]
  %v82 = vld [vmem:[%s1 + $0x1d8] sm:$0xff]
  %v83 = vld [vmem:[%s1 + $0x1e0] sm:$0xff]
  %v84 = vld [vmem:[%s1 + $0x1e8] sm:$0xff]
  %v85 = vld [vmem:[%s1 + $0x1f0] sm:$0xff]
  %v86 = vld [vmem:[%s1 + $0x1f8] sm:$0xff]
  %v87 = vld [vmem:[#allocation2] sm:$0xff]
  %v88 = vld [vmem:[#allocation3] sm:$0xff]
  %v89 = vld [vmem:[%s0] sm:$0xff]
  %v90 = vld [vmem:[%s0 + $0x8] sm:$0xff]
  %v91 = vld [vmem:[%s0 + $0x10] sm:$0xff]
  %v92 = vld [vmem:[%s0 + $0x18] sm:$0xff]
  %93 = vmatprep.subr.mxu0 %v84
  %94 = vmatpush1.msra.mxu0 %v83
  %95 = vmatprep.subr.mxu0 %v80
  %96 = vmatpush1.msra.mxu0 %v79
  %97 = vmatprep.subr.mxu0 %v76
  %98 = vmatpush1.msra.mxu0 %v75
  %99 = vmatprep.subr.mxu0 %v72
  %100 = vmatpush1.msra.mxu0 %v71
  %101 = vmatprep.subr.mxu0 %v68
  %102 = vmatpush1.msra.mxu0 %v67
  %103 = vmatprep.subr.mxu0 %v64
  %104 = vmatpush1.msra.mxu0 %v63
  %105 = vmatprep.subr.mxu0 %v60
  %106 = vmatpush1.msra.mxu0 %v59
  %107 = vmatprep.subr.mxu0 %v56
  %108 = vmatpush1.msra.mxu0 %v55
  %109 = vmatprep.subr.mxu0 %v52
  %110 = vmatpush1.msra.mxu0 %v51
  %111 = vmatprep.subr.mxu0 %v48
  %112 = vmatpush1.msra.mxu0 %v47
  %113 = vmatprep.subr.mxu0 %v44
  %114 = vmatpush1.msra.mxu0 %v43
  %115 = vmatprep.subr.mxu0 %v40
  %116 = vmatpush1.msra.mxu0 %v39
  %117 = vmatprep.subr.mxu0 %v36
  %118 = vmatpush1.msra.mxu0 %v35
  %119 = vmatprep.subr.mxu0 %v32
  %120 = vmatpush1.msra.mxu0 %v31
  %121 = vmatprep.subr.mxu0 %v28
  %122 = vmatpush1.msra.mxu0 %v27
  %123 = vmatprep.subr.mxu0 %v24
  %124 = vmatpush1.msra.mxu0 %v23
  %125 = vmatprep.subr.mxu0 0.0
  %126 = vmatpush2.msra.mxu0 0.0
  %127 = vmatprep.subr.mxu0 0.0
  %128 = vmatpush2.msra.mxu0 0.0
  %129 = vmatprep.subr.mxu0 0.0
  %130 = vmatpush2.msra.mxu0 0.0
  %131 = vmatprep.subr.mxu0 0.0
  %132 = vmatpush2.msra.mxu0 0.0
  %133 = vmatprep.subr.mxu0 0.0
  %134 = vmatpush2.msra.mxu0 0.0
  %135 = vmatprep.subr.mxu0 0.0
  %136 = vmatpush2.msra.mxu0 0.0
  %137 = vmatprep.subr.mxu0 0.0
  %138 = vmatpush2.msra.mxu0 0.0
  %139 = vmatprep.subr.mxu0 0.0
  %140 = vmatpush2.msra.mxu0 0.0
  %141 = vmatprep.subr.mxu0 0.0
  %142 = vmatpush2.msra.mxu0 0.0
  %143 = vmatprep.subr.mxu0 0.0
  %144 = vmatpush2.msra.mxu0 0.0
  %145 = vmatprep.subr.mxu0 0.0
  %146 = vmatpush2.msra.mxu0 0.0
  %147 = vmatprep.subr.mxu0 0.0
  %148 = vmatpush2.msra.mxu0 0.0
  %149 = vmatprep.subr.mxu0 0.0
  %150 = vmatpush2.msra.mxu0 0.0
  %151 = vmatprep.subr.mxu0 0.0
  %152 = vmatpush2.msra.mxu0 0.0
  %153 = vmatprep.subr.mxu0 0.0
  %154 = vmatpush2.msra.mxu0 0.0
  %155 = vmatprep.subr.mxu0 0.0
  %156 = vmatpush2.msra.mxu0 0.0
  %157 = vmatprep.mubr.f32.mxu0 0.0
  %158 = vmatmul.mubr.f32.gmra.mxu0 %v87
  %v159 = vpop.f32.mrf.mxu0
  %v160 = vadd.f32 0.0, %v159
  %v161 = vpop.f32.mrf.mxu0
  %v162 = vadd.f32 0.0, %v161
  %163 = vdwg.mxu0
  %164 = vmatprep.subr.mxu0 %v86
  %165 = vmatpush1.msra.mxu0 %v85
  %166 = vmatprep.subr.mxu0 %v82
  %167 = vmatpush1.msra.mxu0 %v81
  %168 = vmatprep.subr.mxu0 %v78
  %169 = vmatpush1.msra.mxu0 %v77
  %170 = vmatprep.subr.mxu0 %v74
  %171 = vmatpush1.msra.mxu0 %v73
  %172 = vmatprep.subr.mxu0 %v70
  %173 = vmatpush1.msra.mxu0 %v69
  %174 = vmatprep.subr.mxu0 %v66
  %175 = vmatpush1.msra.mxu0 %v65
  %176 = vmatprep.subr.mxu0 %v62
  %177 = vmatpush1.msra.mxu0 %v61
  %178 = vmatprep.subr.mxu0 %v58
  %179 = vmatpush1.msra.mxu0 %v57
  %180 = vmatprep.subr.mxu0 %v54
  %181 = vmatpush1.msra.mxu0 %v53
  %182 = vmatprep.subr.mxu0 %v50
  %183 = vmatpush1.msra.mxu0 %v49
  %184 = vmatprep.subr.mxu0 %v46
  %185 = vmatpush1.msra.mxu0 %v45
  %186 = vmatprep.subr.mxu0 %v42
  %187 = vmatpush1.msra.mxu0 %v41
  %188 = vmatprep.subr.mxu0 %v38
  %189 = vmatpush1.msra.mxu0 %v37
  %190 = vmatprep.subr.mxu0 %v34
  %191 = vmatpush1.msra.mxu0 %v33
  %192 = vmatprep.subr.mxu0 %v30
  %193 = vmatpush1.msra.mxu0 %v29
  %194 = vmatprep.subr.mxu0 %v26
  %195 = vmatpush1.msra.mxu0 %v25
  %196 = vmatprep.subr.mxu0 0.0
  %197 = vmatpush2.msra.mxu0 0.0
  %198 = vmatprep.subr.mxu0 0.0
  %199 = vmatpush2.msra.mxu0 0.0
  %200 = vmatprep.subr.mxu0 0.0
  %201 = vmatpush2.msra.mxu0 0.0
  %202 = vmatprep.subr.mxu0 0.0
  %203 = vmatpush2.msra.mxu0 0.0
  %204 = vmatprep.subr.mxu0 0.0
  %205 = vmatpush2.msra.mxu0 0.0
  %206 = vmatprep.subr.mxu0 0.0
  %207 = vmatpush2.msra.mxu0 0.0
  %208 = vmatprep.subr.mxu0 0.0
  %209 = vmatpush2.msra.mxu0 0.0
  %210 = vmatprep.subr.mxu0 0.0
  %211 = vmatpush2.msra.mxu0 0.0
  %212 = vmatprep.subr.mxu0 0.0
  %213 = vmatpush2.msra.mxu0 0.0
  %214 = vmatprep.subr.mxu0 0.0
  %215 = vmatpush2.msra.mxu0 0.0
  %216 = vmatprep.subr.mxu0 0.0
  %217 = vmatpush2.msra.mxu0 0.0
  %218 = vmatprep.subr.mxu0 0.0
  %219 = vmatpush2.msra.mxu0 0.0
  %220 = vmatprep.subr.mxu0 0.0
  %221 = vmatpush2.msra.mxu0 0.0
  %222 = vmatprep.subr.mxu0 0.0
  %223 = vmatpush2.msra.mxu0 0.0
  %224 = vmatprep.subr.mxu0 0.0
  %225 = vmatpush2.msra.mxu0 0.0
  %226 = vmatprep.subr.mxu0 0.0
  %227 = vmatpush2.msra.mxu0 0.0
  %228 = vmatprep.mubr.f32.mxu0 0.0
  %229 = vmatmul.mubr.f32.gmra.mxu0 %v87
  %v230 = vpop.f32.mrf.mxu0
  %v231 = vadd.f32 0.0, %v230
  %v232 = vpop.f32.mrf.mxu0
  %v233 = vadd.f32 0.0, %v232
  %234 = vdwg.mxu0
  %v235 = vadd.f32 %v89, %v160
  %v236 = vadd.f32 %v90, %v162
  %v237 = vadd.f32 %v91, %v231
  %v238 = vadd.f32 %v92, %v233
  %v239 = vxor.u32 %v235, 2147483648
  %v240 = vmul.f32 %v239, 1.442695
  %v241 = vpow.pop %v240
  %v242 = vadd.f32 %v241, 1.0
  %v243 = vrcp.pop %v242
  %v244 = vmul.f32 1.0, %v243
  %v245 = vxor.u32 %v236, 2147483648
  %v246 = vmul.f32 %v245, 1.442695
  %v247 = vpow.pop %v246
  %v248 = vadd.f32 %v247, 1.0
  %v249 = vrcp.pop %v248
  %v250 = vmul.f32 1.0, %v249
  %v251 = vtanh.pop %v237
  %v252 = vxor.u32 %v238, 2147483648
  %v253 = vmul.f32 %v252, 1.442695
  %v254 = vpow.pop %v253
  %v255 = vadd.f32 %v254, 1.0
  %v256 = vrcp.pop %v255
  %v257 = vmul.f32 1.0, %v256
  %v258 = vmul.f32 %v250, %v88
  %v259 = vmul.f32 %v244, %v251
  %v260 = vadd.f32 %v258, %v259
  %v261 = vtanh.pop %v260
  %v262 = vmul.f32 %v257, %v261
  %s263 = scalar_lea.vmem %s0, 32
  %v264 = vld [vmem:[%s263] sm:$0xff]
  %v265 = vld [vmem:[%s263 + $0x8] sm:$0xff]
  %v266 = vld [vmem:[%s263 + $0x10] sm:$0xff]
  %v267 = vld [vmem:[%s263 + $0x18] sm:$0xff]
  %268 = vmatprep.subr.mxu0 %v84
  %269 = vmatpush1.msra.mxu0 %v83
  %270 = vmatprep.subr.mxu0 %v80
  %271 = vmatpush1.msra.mxu0 %v79
  %272 = vmatprep.subr.mxu0 %v76
  %273 = vmatpush1.msra.mxu0 %v75
  %274 = vmatprep.subr.mxu0 %v72
  %275 = vmatpush1.msra.mxu0 %v71
  %276 = vmatprep.subr.mxu0 %v68
  %277 = vmatpush1.msra.mxu0 %v67
  %278 = vmatprep.subr.mxu0 %v64
  %279 = vmatpush1.msra.mxu0 %v63
  %280 = vmatprep.subr.mxu0 %v60
  %281 = vmatpush1.msra.mxu0 %v59
  %282 = vmatprep.subr.mxu0 %v56
  %283 = vmatpush1.msra.mxu0 %v55
  %284 = vmatprep.subr.mxu0 %v52
  %285 = vmatpush1.msra.mxu0 %v51
  %286 = vmatprep.subr.mxu0 %v48
  %287 = vmatpush1.msra.mxu0 %v47
  %288 = vmatprep.subr.mxu0 %v44
  %289 = vmatpush1.msra.mxu0 %v43
  %290 = vmatprep.subr.mxu0 %v40
  %291 = vmatpush1.msra.mxu0 %v39
  %292 = vmatprep.subr.mxu0 %v36
  %293 = vmatpush1.msra.mxu0 %v35
  %294 = vmatprep.subr.mxu0 %v32
  %295 = vmatpush1.msra.mxu0 %v31
  %296 = vmatprep.subr.mxu0 %v28
  %297 = vmatpush1.msra.mxu0 %v27
  %298 = vmatprep.subr.mxu0 %v24
  %299 = vmatpush1.msra.mxu0 %v23
  %300 = vmatprep.subr.mxu0 0.0
  %301 = vmatpush2.msra.mxu0 0.0
  %302 = vmatprep.subr.mxu0 0.0
  %303 = vmatpush2.msra.mxu0 0.0
  %304 = vmatprep.subr.mxu0 0.0
  %305 = vmatpush2.msra.mxu0 0.0
  %306 = vmatprep.subr.mxu0 0.0
  %307 = vmatpush2.msra.mxu0 0.0
  %308 = vmatprep.subr.mxu0 0.0
  %309 = vmatpush2.msra.mxu0 0.0
  %310 = vmatprep.subr.mxu0 0.0
  %311 = vmatpush2.msra.mxu0 0.0
  %312 = vmatprep.subr.mxu0 0.0
  %313 = vmatpush2.msra.mxu0 0.0
  %314 = vmatprep.subr.mxu0 0.0
  %315 = vmatpush2.msra.mxu0 0.0
  %316 = vmatprep.subr.mxu0 0.0
  %317 = vmatpush2.msra.mxu0 0.0
  %318 = vmatprep.subr.mxu0 0.0
  %319 = vmatpush2.msra.mxu0 0.0
  %320 = vmatprep.subr.mxu0 0.0
  %321 = vmatpush2.msra.mxu0 0.0
  %322 = vmatprep.subr.mxu0 0.0
  %323 = vmatpush2.msra.mxu0 0.0
  %324 = vmatprep.subr.mxu0 0.0
  %325 = vmatpush2.msra.mxu0 0.0
  %326 = vmatprep.subr.mxu0 0.0
  %327 = vmatpush2.msra.mxu0 0.0
  %328 = vmatprep.subr.mxu0 0.0
  %329 = vmatpush2.msra.mxu0 0.0
  %330 = vmatprep.subr.mxu0 0.0
  %331 = vmatpush2.msra.mxu0 0.0
  %332 = vmatprep.mubr.f32.mxu0 0.0
  %333 = vmatmul.mubr.f32.gmra.mxu0 %v262
  %v334 = vpop.f32.mrf.mxu0
  %v335 = vadd.f32 0.0, %v334
  %v336 = vpop.f32.mrf.mxu0
  %v337 = vadd.f32 0.0, %v336
  %338 = vdwg.mxu0
  %339 = vmatprep.subr.mxu0 %v86
  %340 = vmatpush1.msra.mxu0 %v85
  %341 = vmatprep.subr.mxu0 %v82
  %342 = vmatpush1.msra.mxu0 %v81
  %343 = vmatprep.subr.mxu0 %v78
  %344 = vmatpush1.msra.mxu0 %v77
  %345 = vmatprep.subr.mxu0 %v74
  %346 = vmatpush1.msra.mxu0 %v73
  %347 = vmatprep.subr.mxu0 %v70
  %348 = vmatpush1.msra.mxu0 %v69
  %349 = vmatprep.subr.mxu0 %v66
  %350 = vmatpush1.msra.mxu0 %v65
  %351 = vmatprep.subr.mxu0 %v62
  %352 = vmatpush1.msra.mxu0 %v61
  %353 = vmatprep.subr.mxu0 %v58
  %354 = vmatpush1.msra.mxu0 %v57
  %355 = vmatprep.subr.mxu0 %v54
  %356 = vmatpush1.msra.mxu0 %v53
  %357 = vmatprep.subr.mxu0 %v50
  %358 = vmatpush1.msra.mxu0 %v49
  %359 = vmatprep.subr.mxu0 %v46
  %360 = vmatpush1.msra.mxu0 %v45
  %361 = vmatprep.subr.mxu0 %v42
  %362 = vmatpush1.msra.mxu0 %v41
  %363 = vmatprep.subr.mxu0 %v38
  %364 = vmatpush1.msra.mxu0 %v37
  %365 = vmatprep.subr.mxu0 %v34
  %366 = vmatpush1.msra.mxu0 %v33
  %367 = vmatprep.subr.mxu0 %v30
  %368 = vmatpush1.msra.mxu0 %v29
  %369 = vmatprep.subr.mxu0 %v26
  %370 = vmatpush1.msra.mxu0 %v25
  %371 = vmatprep.subr.mxu0 0.0
  %372 = vmatpush2.msra.mxu0 0.0
  %373 = vmatprep.subr.mxu0 0.0
  %374 = vmatpush2.msra.mxu0 0.0
  %375 = vmatprep.subr.mxu0 0.0
  %376 = vmatpush2.msra.mxu0 0.0
  %377 = vmatprep.subr.mxu0 0.0
  %378 = vmatpush2.msra.mxu0 0.0
  %379 = vmatprep.subr.mxu0 0.0
  %380 = vmatpush2.msra.mxu0 0.0
  %381 = vmatprep.subr.mxu0 0.0
  %382 = vmatpush2.msra.mxu0 0.0
  %383 = vmatprep.subr.mxu0 0.0
  %384 = vmatpush2.msra.mxu0 0.0
  %385 = vmatprep.subr.mxu0 0.0
  %386 = vmatpush2.msra.mxu0 0.0
  %387 = vmatprep.subr.mxu0 0.0
  %388 = vmatpush2.msra.mxu0 0.0
  %389 = vmatprep.subr.mxu0 0.0
  %390 = vmatpush2.msra.mxu0 0.0
  %391 = vmatprep.subr.mxu0 0.0
  %392 = vmatpush2.msra.mxu0 0.0
  %393 = vmatprep.subr.mxu0 0.0
  %394 = vmatpush2.msra.mxu0 0.0
  %395 = vmatprep.subr.mxu0 0.0
  %396 = vmatpush2.msra.mxu0 0.0
  %397 = vmatprep.subr.mxu0 0.0
  %398 = vmatpush2.msra.mxu0 0.0
  %399 = vmatprep.subr.mxu0 0.0
  %400 = vmatpush2.msra.mxu0 0.0
  %401 = vmatprep.subr.mxu0 0.0
  %402 = vmatpush2.msra.mxu0 0.0
  %403 = vmatprep.mubr.f32.mxu0 0.0
  %404 = vmatmul.mubr.f32.gmra.mxu0 %v262
  %v405 = vpop.f32.mrf.mxu0
  %v406 = vadd.f32 0.0, %v405
  %v407 = vpop.f32.mrf.mxu0
  %v408 = vadd.f32 0.0, %v407
  %409 = vdwg.mxu0
  %v410 = vadd.f32 %v264, %v335
  %v411 = vadd.f32 %v265, %v337
  %v412 = vadd.f32 %v266, %v406
  %v413 = vadd.f32 %v267, %v408
  %v414 = vxor.u32 %v410, 2147483648
  %v415 = vmul.f32 %v414, 1.442695
  %v416 = vpow.pop %v415
  %v417 = vadd.f32 %v416, 1.0
  %v418 = vrcp.pop %v417
  %v419 = vmul.f32 1.0, %v418
  %v420 = vxor.u32 %v411, 2147483648
  %v421 = vmul.f32 %v420, 1.442695
  %v422 = vpow.pop %v421
  %v423 = vadd.f32 %v422, 1.0
  %v424 = vrcp.pop %v423
  %v425 = vmul.f32 1.0, %v424
  %v426 = vtanh.pop %v412
  %v427 = vxor.u32 %v413, 2147483648
  %v428 = vmul.f32 %v427, 1.442695
  %v429 = vpow.pop %v428
  %v430 = vadd.f32 %v429, 1.0
  %v431 = vrcp.pop %v430
  %v432 = vmul.f32 1.0, %v431
  %v433 = vmul.f32 %v425, %v260
  %v434 = vmul.f32 %v419, %v426
  %v435 = vadd.f32 %v433, %v434
  %v436 = vtanh.pop %v435
  %v437 = vmul.f32 %v432, %v436
  %s438 = scalar_lea.vmem %s0, 64
  %v439 = vld [vmem:[%s438] sm:$0xff]
  %v440 = vld [vmem:[%s438 + $0x8] sm:$0xff]
  %v441 = vld [vmem:[%s438 + $0x10] sm:$0xff]
  %v442 = vld [vmem:[%s438 + $0x18] sm:$0xff]
  %443 = vmatprep.subr.mxu0 %v84
  %444 = vmatpush1.msra.mxu0 %v83
  %445 = vmatprep.subr.mxu0 %v80
  %446 = vmatpush1.msra.mxu0 %v79
  %447 = vmatprep.subr.mxu0 %v76
  %448 = vmatpush1.msra.mxu0 %v75
  %449 = vmatprep.subr.mxu0 %v72
  %450 = vmatpush1.msra.mxu0 %v71
  %451 = vmatprep.subr.mxu0 %v68
  %452 = vmatpush1.msra.mxu0 %v67
  %453 = vmatprep.subr.mxu0 %v64
  %454 = vmatpush1.msra.mxu0 %v63
  %455 = vmatprep.subr.mxu0 %v60
  %456 = vmatpush1.msra.mxu0 %v59
  %457 = vmatprep.subr.mxu0 %v56
  %458 = vmatpush1.msra.mxu0 %v55
  %459 = vmatprep.subr.mxu0 %v52
  %460 = vmatpush1.msra.mxu0 %v51
  %461 = vmatprep.subr.mxu0 %v48
  %462 = vmatpush1.msra.mxu0 %v47
  %463 = vmatprep.subr.mxu0 %v44
  %464 = vmatpush1.msra.mxu0 %v43
  %465 = vmatprep.subr.mxu0 %v40
  %466 = vmatpush1.msra.mxu0 %v39
  %467 = vmatprep.subr.mxu0 %v36
  %468 = vmatpush1.msra.mxu0 %v35
  %469 = vmatprep.subr.mxu0 %v32
  %470 = vmatpush1.msra.mxu0 %v31
  %471 = vmatprep.subr.mxu0 %v28
  %472 = vmatpush1.msra.mxu0 %v27
  %473 = vmatprep.subr.mxu0 %v24
  %474 = vmatpush1.msra.mxu0 %v23
  %475 = vmatprep.subr.mxu0 0.0
  %476 = vmatpush2.msra.mxu0 0.0
  %477 = vmatprep.subr.mxu0 0.0
  %478 = vmatpush2.msra.mxu0 0.0
  %479 = vmatprep.subr.mxu0 0.0
  %480 = vmatpush2.msra.mxu0 0.0
  %481 = vmatprep.subr.mxu0 0.0
  %482 = vmatpush2.msra.mxu0 0.0
  %483 = vmatprep.subr.mxu0 0.0
  %484 = vmatpush2.msra.mxu0 0.0
  %485 = vmatprep.subr.mxu0 0.0
  %486 = vmatpush2.msra.mxu0 0.0
  %487 = vmatprep.subr.mxu0 0.0
  %488 = vmatpush2.msra.mxu0 0.0
  %489 = vmatprep.subr.mxu0 0.0
  %490 = vmatpush2.msra.mxu0 0.0
  %491 = vmatprep.subr.mxu0 0.0
  %492 = vmatpush2.msra.mxu0 0.0
  %493 = vmatprep.subr.mxu0 0.0
  %494 = vmatpush2.msra.mxu0 0.0
  %495 = vmatprep.subr.mxu0 0.0
  %496 = vmatpush2.msra.mxu0 0.0
  %497 = vmatprep.subr.mxu0 0.0
  %498 = vmatpush2.msra.mxu0 0.0
  %499 = vmatprep.subr.mxu0 0.0
  %500 = vmatpush2.msra.mxu0 0.0
  %501 = vmatprep.subr.mxu0 0.0
  %502 = vmatpush2.msra.mxu0 0.0
  %503 = vmatprep.subr.mxu0 0.0
  %504 = vmatpush2.msra.mxu0 0.0
  %505 = vmatprep.subr.mxu0 0.0
  %506 = vmatpush2.msra.mxu0 0.0
  %507 = vmatprep.mubr.f32.mxu0 0.0
  %508 = vmatmul.mubr.f32.gmra.mxu0 %v437
  %v509 = vpop.f32.mrf.mxu0
  %v510 = vadd.f32 0.0, %v509
  %v511 = vpop.f32.mrf.mxu0
  %v512 = vadd.f32 0.0, %v511
  %513 = vdwg.mxu0
  %514 = vmatprep.subr.mxu0 %v86
  %515 = vmatpush1.msra.mxu0 %v85
  %516 = vmatprep.subr.mxu0 %v82
  %517 = vmatpush1.msra.mxu0 %v81
  %518 = vmatprep.subr.mxu0 %v78
  %519 = vmatpush1.msra.mxu0 %v77
  %520 = vmatprep.subr.mxu0 %v74
  %521 = vmatpush1.msra.mxu0 %v73
  %522 = vmatprep.subr.mxu0 %v70
  %523 = vmatpush1.msra.mxu0 %v69
  %524 = vmatprep.subr.mxu0 %v66
  %525 = vmatpush1.msra.mxu0 %v65
  %526 = vmatprep.subr.mxu0 %v62
  %527 = vmatpush1.msra.mxu0 %v61
  %528 = vmatprep.subr.mxu0 %v58
  %529 = vmatpush1.msra.mxu0 %v57
  %530 = vmatprep.subr.mxu0 %v54
  %531 = vmatpush1.msra.mxu0 %v53
  %532 = vmatprep.subr.mxu0 %v50
  %533 = vmatpush1.msra.mxu0 %v49
  %534 = vmatprep.subr.mxu0 %v46
  %535 = vmatpush1.msra.mxu0 %v45
  %536 = vmatprep.subr.mxu0 %v42
  %537 = vmatpush1.msra.mxu0 %v41
  %538 = vmatprep.subr.mxu0 %v38
  %539 = vmatpush1.msra.mxu0 %v37
  %540 = vmatprep.subr.mxu0 %v34
  %541 = vmatpush1.msra.mxu0 %v33
  %542 = vmatprep.subr.mxu0 %v30
  %543 = vmatpush1.msra.mxu0 %v29
  %544 = vmatprep.subr.mxu0 %v26
  %545 = vmatpush1.msra.mxu0 %v25
  %546 = vmatprep.subr.mxu0 0.0
  %547 = vmatpush2.msra.mxu0 0.0
  %548 = vmatprep.subr.mxu0 0.0
  %549 = vmatpush2.msra.mxu0 0.0
  %550 = vmatprep.subr.mxu0 0.0
  %551 = vmatpush2.msra.mxu0 0.0
  %552 = vmatprep.subr.mxu0 0.0
  %553 = vmatpush2.msra.mxu0 0.0
  %554 = vmatprep.subr.mxu0 0.0
  %555 = vmatpush2.msra.mxu0 0.0
  %556 = vmatprep.subr.mxu0 0.0
  %557 = vmatpush2.msra.mxu0 0.0
  %558 = vmatprep.subr.mxu0 0.0
  %559 = vmatpush2.msra.mxu0 0.0
  %560 = vmatprep.subr.mxu0 0.0
  %561 = vmatpush2.msra.mxu0 0.0
  %562 = vmatprep.subr.mxu0 0.0
  %563 = vmatpush2.msra.mxu0 0.0
  %564 = vmatprep.subr.mxu0 0.0
  %565 = vmatpush2.msra.mxu0 0.0
  %566 = vmatprep.subr.mxu0 0.0
  %567 = vmatpush2.msra.mxu0 0.0
  %568 = vmatprep.subr.mxu0 0.0
  %569 = vmatpush2.msra.mxu0 0.0
  %570 = vmatprep.subr.mxu0 0.0
  %571 = vmatpush2.msra.mxu0 0.0
  %572 = vmatprep.subr.mxu0 0.0
  %573 = vmatpush2.msra.mxu0 0.0
  %574 = vmatprep.subr.mxu0 0.0
  %575 = vmatpush2.msra.mxu0 0.0
  %576 = vmatprep.subr.mxu0 0.0
  %577 = vmatpush2.msra.mxu0 0.0
  %578 = vmatprep.mubr.f32.mxu0 0.0
  %579 = vmatmul.mubr.f32.gmra.mxu0 %v437
  %v580 = vpop.f32.mrf.mxu0
  %v581 = vadd.f32 0.0, %v580
  %v582 = vpop.f32.mrf.mxu0
  %v583 = vadd.f32 0.0, %v582
  %584 = vdwg.mxu0
  %v585 = vadd.f32 %v439, %v510
  %v586 = vadd.f32 %v440, %v512
  %v587 = vadd.f32 %v441, %v581
  %v588 = vadd.f32 %v442, %v583
  %v589 = vxor.u32 %v585, 2147483648
  %v590 = vmul.f32 %v589, 1.442695
  %v591 = vpow.pop %v590
  %v592 = vadd.f32 %v591, 1.0
  %v593 = vrcp.pop %v592
  %v594 = vmul.f32 1.0, %v593
  %v595 = vxor.u32 %v586, 2147483648
  %v596 = vmul.f32 %v595, 1.442695
  %v597 = vpow.pop %v596
  %v598 = vadd.f32 %v597, 1.0
  %v599 = vrcp.pop %v598
  %v600 = vmul.f32 1.0, %v599
  %v601 = vtanh.pop %v587
  %v602 = vxor.u32 %v588, 2147483648
  %v603 = vmul.f32 %v602, 1.442695
  %v604 = vpow.pop %v603
  %v605 = vadd.f32 %v604, 1.0
  %v606 = vrcp.pop %v605
  %v607 = vmul.f32 1.0, %v606
  %v608 = vmul.f32 %v600, %v435
  %v609 = vmul.f32 %v594, %v601
  %v610 = vadd.f32 %v608, %v609
  %v611 = vtanh.pop %v610
  %v612 = vmul.f32 %v607, %v611
  %s613 = scalar_lea.vmem %s0, 96
  %v614 = vld [vmem:[%s613] sm:$0xff]
  %v615 = vld [vmem:[%s613 + $0x8] sm:$0xff]
  %v616 = vld [vmem:[%s613 + $0x10] sm:$0xff]
  %v617 = vld [vmem:[%s613 + $0x18] sm:$0xff]
  %618 = vmatprep.subr.mxu0 %v84
  %619 = vmatpush1.msra.mxu0 %v83
  %620 = vmatprep.subr.mxu0 %v80
  %621 = vmatpush1.msra.mxu0 %v79
  %622 = vmatprep.subr.mxu0 %v76
  %623 = vmatpush1.msra.mxu0 %v75
  %624 = vmatprep.subr.mxu0 %v72
  %625 = vmatpush1.msra.mxu0 %v71
  %626 = vmatprep.subr.mxu0 %v68
  %627 = vmatpush1.msra.mxu0 %v67
  %628 = vmatprep.subr.mxu0 %v64
  %629 = vmatpush1.msra.mxu0 %v63
  %630 = vmatprep.subr.mxu0 %v60
  %631 = vmatpush1.msra.mxu0 %v59
  %632 = vmatprep.subr.mxu0 %v56
  %633 = vmatpush1.msra.mxu0 %v55
  %634 = vmatprep.subr.mxu0 %v52
  %635 = vmatpush1.msra.mxu0 %v51
  %636 = vmatprep.subr.mxu0 %v48
  %637 = vmatpush1.msra.mxu0 %v47
  %638 = vmatprep.subr.mxu0 %v44
  %639 = vmatpush1.msra.mxu0 %v43
  %640 = vmatprep.subr.mxu0 %v40
  %641 = vmatpush1.msra.mxu0 %v39
  %642 = vmatprep.subr.mxu0 %v36
  %643 = vmatpush1.msra.mxu0 %v35
  %644 = vmatprep.subr.mxu0 %v32
  %645 = vmatpush1.msra.mxu0 %v31
  %646 = vmatprep.subr.mxu0 %v28
  %647 = vmatpush1.msra.mxu0 %v27
  %648 = vmatprep.subr.mxu0 %v24
  %649 = vmatpush1.msra.mxu0 %v23
  %650 = vmatprep.subr.mxu0 0.0
  %651 = vmatpush2.msra.mxu0 0.0
  %652 = vmatprep.subr.mxu0 0.0
  %653 = vmatpush2.msra.mxu0 0.0
  %654 = vmatprep.subr.mxu0 0.0
  %655 = vmatpush2.msra.mxu0 0.0
  %656 = vmatprep.subr.mxu0 0.0
  %657 = vmatpush2.msra.mxu0 0.0
  %658 = vmatprep.subr.mxu0 0.0
  %659 = vmatpush2.msra.mxu0 0.0
  %660 = vmatprep.subr.mxu0 0.0
  %661 = vmatpush2.msra.mxu0 0.0
  %662 = vmatprep.subr.mxu0 0.0
  %663 = vmatpush2.msra.mxu0 0.0
  %664 = vmatprep.subr.mxu0 0.0
  %665 = vmatpush2.msra.mxu0 0.0
  %666 = vmatprep.subr.mxu0 0.0
  %667 = vmatpush2.msra.mxu0 0.0
  %668 = vmatprep.subr.mxu0 0.0
  %669 = vmatpush2.msra.mxu0 0.0
  %670 = vmatprep.subr.mxu0 0.0
  %671 = vmatpush2.msra.mxu0 0.0
  %672 = vmatprep.subr.mxu0 0.0
  %673 = vmatpush2.msra.mxu0 0.0
  %674 = vmatprep.subr.mxu0 0.0
  %675 = vmatpush2.msra.mxu0 0.0
  %676 = vmatprep.subr.mxu0 0.0
  %677 = vmatpush2.msra.mxu0 0.0
  %678 = vmatprep.subr.mxu0 0.0
  %679 = vmatpush2.msra.mxu0 0.0
  %680 = vmatprep.subr.mxu0 0.0
  %681 = vmatpush2.msra.mxu0 0.0
  %682 = vmatprep.mubr.f32.mxu0 0.0
  %683 = vmatmul.mubr.f32.gmra.mxu0 %v612
  %v684 = vpop.f32.mrf.mxu0
  %v685 = vadd.f32 0.0, %v684
  %v686 = vpop.f32.mrf.mxu0
  %v687 = vadd.f32 0.0, %v686
  %688 = vdwg.mxu0
  %689 = vmatprep.subr.mxu0 %v86
  %690 = vmatpush1.msra.mxu0 %v85
  %691 = vmatprep.subr.mxu0 %v82
  %692 = vmatpush1.msra.mxu0 %v81
  %693 = vmatprep.subr.mxu0 %v78
  %694 = vmatpush1.msra.mxu0 %v77
  %695 = vmatprep.subr.mxu0 %v74
  %696 = vmatpush1.msra.mxu0 %v73
  %697 = vmatprep.subr.mxu0 %v70
  %698 = vmatpush1.msra.mxu0 %v69
  %699 = vmatprep.subr.mxu0 %v66
  %700 = vmatpush1.msra.mxu0 %v65
  %701 = vmatprep.subr.mxu0 %v62
  %702 = vmatpush1.msra.mxu0 %v61
  %703 = vmatprep.subr.mxu0 %v58
  %704 = vmatpush1.msra.mxu0 %v57
  %705 = vmatprep.subr.mxu0 %v54
  %706 = vmatpush1.msra.mxu0 %v53
  %707 = vmatprep.subr.mxu0 %v50
  %708 = vmatpush1.msra.mxu0 %v49
  %709 = vmatprep.subr.mxu0 %v46
  %710 = vmatpush1.msra.mxu0 %v45
  %711 = vmatprep.subr.mxu0 %v42
  %712 = vmatpush1.msra.mxu0 %v41
  %713 = vmatprep.subr.mxu0 %v38
  %714 = vmatpush1.msra.mxu0 %v37
  %715 = vmatprep.subr.mxu0 %v34
  %716 = vmatpush1.msra.mxu0 %v33
  %717 = vmatprep.subr.mxu0 %v30
  %718 = vmatpush1.msra.mxu0 %v29
  %719 = vmatprep.subr.mxu0 %v26
  %720 = vmatpush1.msra.mxu0 %v25
  %721 = vmatprep.subr.mxu0 0.0
  %722 = vmatpush2.msra.mxu0 0.0
  %723 = vmatprep.subr.mxu0 0.0
  %724 = vmatpush2.msra.mxu0 0.0
  %725 = vmatprep.subr.mxu0 0.0
  %726 = vmatpush2.msra.mxu0 0.0
  %727 = vmatprep.subr.mxu0 0.0
  %728 = vmatpush2.msra.mxu0 0.0
  %729 = vmatprep.subr.mxu0 0.0
  %730 = vmatpush2.msra.mxu0 0.0
  %731 = vmatprep.subr.mxu0 0.0
  %732 = vmatpush2.msra.mxu0 0.0
  %733 = vmatprep.subr.mxu0 0.0
  %734 = vmatpush2.msra.mxu0 0.0
  %735 = vmatprep.subr.mxu0 0.0
  %736 = vmatpush2.msra.mxu0 0.0
  %737 = vmatprep.subr.mxu0 0.0
  %738 = vmatpush2.msra.mxu0 0.0
  %739 = vmatprep.subr.mxu0 0.0
  %740 = vmatpush2.msra.mxu0 0.0
  %741 = vmatprep.subr.mxu0 0.0
  %742 = vmatpush2.msra.mxu0 0.0
  %743 = vmatprep.subr.mxu0 0.0
  %744 = vmatpush2.msra.mxu0 0.0
  %745 = vmatprep.subr.mxu0 0.0
  %746 = vmatpush2.msra.mxu0 0.0
  %747 = vmatprep.subr.mxu0 0.0
  %748 = vmatpush2.msra.mxu0 0.0
  %749 = vmatprep.subr.mxu0 0.0
  %750 = vmatpush2.msra.mxu0 0.0
  %751 = vmatprep.subr.mxu0 0.0
  %752 = vmatpush2.msra.mxu0 0.0
  %753 = vmatprep.mubr.f32.mxu0 0.0
  %754 = vmatmul.mubr.f32.gmra.mxu0 %v612
  %v755 = vpop.f32.mrf.mxu0
  %v756 = vadd.f32 0.0, %v755
  %v757 = vpop.f32.mrf.mxu0
  %v758 = vadd.f32 0.0, %v757
  %759 = vdwg.mxu0
  %v760 = vadd.f32 %v614, %v685
  %v761 = vadd.f32 %v615, %v687
  %v762 = vadd.f32 %v616, %v756
  %v763 = vadd.f32 %v617, %v758
  %v764 = vxor.u32 %v760, 2147483648
  %v765 = vmul.f32 %v764, 1.442695
  %v766 = vpow.pop %v765
  %v767 = vadd.f32 %v766, 1.0
  %v768 = vrcp.pop %v767
  %v769 = vmul.f32 1.0, %v768
  %v770 = vxor.u32 %v761, 2147483648
  %v771 = vmul.f32 %v770, 1.442695
  %v772 = vpow.pop %v771
  %v773 = vadd.f32 %v772, 1.0
  %v774 = vrcp.pop %v773
  %v775 = vmul.f32 1.0, %v774
  %v776 = vtanh.pop %v762
  %v777 = vxor.u32 %v763, 2147483648
  %v778 = vmul.f32 %v777, 1.442695
  %v779 = vpow.pop %v778
  %v780 = vadd.f32 %v779, 1.0
  %v781 = vrcp.pop %v780
  %v782 = vmul.f32 1.0, %v781
  %v783 = vmul.f32 %v775, %v610
  %v784 = vmul.f32 %v769, %v776
  %v785 = vadd.f32 %v783, %v784
  %v786 = vtanh.pop %v785
  %v787 = vmul.f32 %v782, %v786
  %s788 = scalar_lea.vmem %s0, 128
  %v789 = vld [vmem:[%s788] sm:$0xff]
  %v790 = vld [vmem:[%s788 + $0x8] sm:$0xff]
  %v791 = vld [vmem:[%s788 + $0x10] sm:$0xff]
  %v792 = vld [vmem:[%s788 + $0x18] sm:$0xff]
  %793 = vmatprep.subr.mxu0 %v84
  %794 = vmatpush1.msra.mxu0 %v83
  %795 = vmatprep.subr.mxu0 %v80
  %796 = vmatpush1.msra.mxu0 %v79
  %797 = vmatprep.subr.mxu0 %v76
  %798 = vmatpush1.msra.mxu0 %v75
  %799 = vmatprep.subr.mxu0 %v72
  %800 = vmatpush1.msra.mxu0 %v71
  %801 = vmatprep.subr.mxu0 %v68
  %802 = vmatpush1.msra.mxu0 %v67
  %803 = vmatprep.subr.mxu0 %v64
  %804 = vmatpush1.msra.mxu0 %v63
  %805 = vmatprep.subr.mxu0 %v60
  %806 = vmatpush1.msra.mxu0 %v59
  %807 = vmatprep.subr.mxu0 %v56
  %808 = vmatpush1.msra.mxu0 %v55
  %809 = vmatprep.subr.mxu0 %v52
  %810 = vmatpush1.msra.mxu0 %v51
  %811 = vmatprep.subr.mxu0 %v48
  %812 = vmatpush1.msra.mxu0 %v47
  %813 = vmatprep.subr.mxu0 %v44
  %814 = vmatpush1.msra.mxu0 %v43
  %815 = vmatprep.subr.mxu0 %v40
  %816 = vmatpush1.msra.mxu0 %v39
  %817 = vmatprep.subr.mxu0 %v36
  %818 = vmatpush1.msra.mxu0 %v35
  %819 = vmatprep.subr.mxu0 %v32
  %820 = vmatpush1.msra.mxu0 %v31
  %821 = vmatprep.subr.mxu0 %v28
  %822 = vmatpush1.msra.mxu0 %v27
  %823 = vmatprep.subr.mxu0 %v24
  %824 = vmatpush1.msra.mxu0 %v23
  %825 = vmatprep.subr.mxu0 0.0
  %826 = vmatpush2.msra.mxu0 0.0
  %827 = vmatprep.subr.mxu0 0.0
  %828 = vmatpush2.msra.mxu0 0.0
  %829 = vmatprep.subr.mxu0 0.0
  %830 = vmatpush2.msra.mxu0 0.0
  %831 = vmatprep.subr.mxu0 0.0
  %832 = vmatpush2.msra.mxu0 0.0
  %833 = vmatprep.subr.mxu0 0.0
  %834 = vmatpush2.msra.mxu0 0.0
  %835 = vmatprep.subr.mxu0 0.0
  %836 = vmatpush2.msra.mxu0 0.0
  %837 = vmatprep.subr.mxu0 0.0
  %838 = vmatpush2.msra.mxu0 0.0
  %839 = vmatprep.subr.mxu0 0.0
  %840 = vmatpush2.msra.mxu0 0.0
  %841 = vmatprep.subr.mxu0 0.0
  %842 = vmatpush2.msra.mxu0 0.0
  %843 = vmatprep.subr.mxu0 0.0
  %844 = vmatpush2.msra.mxu0 0.0
  %845 = vmatprep.subr.mxu0 0.0
  %846 = vmatpush2.msra.mxu0 0.0
  %847 = vmatprep.subr.mxu0 0.0
  %848 = vmatpush2.msra.mxu0 0.0
  %849 = vmatprep.subr.mxu0 0.0
  %850 = vmatpush2.msra.mxu0 0.0
  %851 = vmatprep.subr.mxu0 0.0
  %852 = vmatpush2.msra.mxu0 0.0
  %853 = vmatprep.subr.mxu0 0.0
  %854 = vmatpush2.msra.mxu0 0.0
  %855 = vmatprep.subr.mxu0 0.0
  %856 = vmatpush2.msra.mxu0 0.0
  %857 = vmatprep.mubr.f32.mxu0 0.0
  %858 = vmatmul.mubr.f32.gmra.mxu0 %v787
  %v859 = vpop.f32.mrf.mxu0
  %v860 = vadd.f32 0.0, %v859
  %v861 = vpop.f32.mrf.mxu0
  %v862 = vadd.f32 0.0, %v861
  %863 = vdwg.mxu0
  %864 = vmatprep.subr.mxu0 %v86
  %865 = vmatpush1.msra.mxu0 %v85
  %866 = vmatprep.subr.mxu0 %v82
  %867 = vmatpush1.msra.mxu0 %v81
  %868 = vmatprep.subr.mxu0 %v78
  %869 = vmatpush1.msra.mxu0 %v77
  %870 = vmatprep.subr.mxu0 %v74
  %871 = vmatpush1.msra.mxu0 %v73
  %872 = vmatprep.subr.mxu0 %v70
  %873 = vmatpush1.msra.mxu0 %v69
  %874 = vmatprep.subr.mxu0 %v66
  %875 = vmatpush1.msra.mxu0 %v65
  %876 = vmatprep.subr.mxu0 %v62
  %877 = vmatpush1.msra.mxu0 %v61
  %878 = vmatprep.subr.mxu0 %v58
  %879 = vmatpush1.msra.mxu0 %v57
  %880 = vmatprep.subr.mxu0 %v54
  %881 = vmatpush1.msra.mxu0 %v53
  %882 = vmatprep.subr.mxu0 %v50
  %883 = vmatpush1.msra.mxu0 %v49
  %884 = vmatprep.subr.mxu0 %v46
  %885 = vmatpush1.msra.mxu0 %v45
  %886 = vmatprep.subr.mxu0 %v42
  %887 = vmatpush1.msra.mxu0 %v41
  %888 = vmatprep.subr.mxu0 %v38
  %889 = vmatpush1.msra.mxu0 %v37
  %890 = vmatprep.subr.mxu0 %v34
  %891 = vmatpush1.msra.mxu0 %v33
  %892 = vmatprep.subr.mxu0 %v30
  %893 = vmatpush1.msra.mxu0 %v29
  %894 = vmatprep.subr.mxu0 %v26
  %895 = vmatpush1.msra.mxu0 %v25
  %896 = vmatprep.subr.mxu0 0.0
  %897 = vmatpush2.msra.mxu0 0.0
  %898 = vmatprep.subr.mxu0 0.0
  %899 = vmatpush2.msra.mxu0 0.0
  %900 = vmatprep.subr.mxu0 0.0
  %901 = vmatpush2.msra.mxu0 0.0
  %902 = vmatprep.subr.mxu0 0.0
  %903 = vmatpush2.msra.mxu0 0.0
  %904 = vmatprep.subr.mxu0 0.0
  %905 = vmatpush2.msra.mxu0 0.0
  %906 = vmatprep.subr.mxu0 0.0
  %907 = vmatpush2.msra.mxu0 0.0
  %908 = vmatprep.subr.mxu0 0.0
  %909 = vmatpush2.msra.mxu0 0.0
  %910 = vmatprep.subr.mxu0 0.0
  %911 = vmatpush2.msra.mxu0 0.0
  %912 = vmatprep.subr.mxu0 0.0
  %913 = vmatpush2.msra.mxu0 0.0
  %914 = vmatprep.subr.mxu0 0.0
  %915 = vmatpush2.msra.mxu0 0.0
  %916 = vmatprep.subr.mxu0 0.0
  %917 = vmatpush2.msra.mxu0 0.0
  %918 = vmatprep.subr.mxu0 0.0
  %919 = vmatpush2.msra.mxu0 0.0
  %920 = vmatprep.subr.mxu0 0.0
  %921 = vmatpush2.msra.mxu0 0.0
  %922 = vmatprep.subr.mxu0 0.0
  %923 = vmatpush2.msra.mxu0 0.0
  %924 = vmatprep.subr.mxu0 0.0
  %925 = vmatpush2.msra.mxu0 0.0
  %926 = vmatprep.subr.mxu0 0.0
  %927 = vmatpush2.msra.mxu0 0.0
  %928 = vmatprep.mubr.f32.mxu0 0.0
  %929 = vmatmul.mubr.f32.gmra.mxu0 %v787
  %v930 = vpop.f32.mrf.mxu0
  %v931 = vadd.f32 0.0, %v930
  %v932 = vpop.f32.mrf.mxu0
  %v933 = vadd.f32 0.0, %v932
  %934 = vdwg.mxu0
  %v935 = vadd.f32 %v789, %v860
  %v936 = vadd.f32 %v790, %v862
  %v937 = vadd.f32 %v791, %v931
  %v938 = vadd.f32 %v792, %v933
  %v939 = vxor.u32 %v935, 2147483648
  %v940 = vmul.f32 %v939, 1.442695
  %v941 = vpow.pop %v940
  %v942 = vadd.f32 %v941, 1.0
  %v943 = vrcp.pop %v942
  %v944 = vmul.f32 1.0, %v943
  %v945 = vxor.u32 %v936, 2147483648
  %v946 = vmul.f32 %v945, 1.442695
  %v947 = vpow.pop %v946
  %v948 = vadd.f32 %v947, 1.0
  %v949 = vrcp.pop %v948
  %v950 = vmul.f32 1.0, %v949
  %v951 = vtanh.pop %v937
  %v952 = vxor.u32 %v938, 2147483648
  %v953 = vmul.f32 %v952, 1.442695
  %v954 = vpow.pop %v953
  %v955 = vadd.f32 %v954, 1.0
  %v956 = vrcp.pop %v955
  %v957 = vmul.f32 1.0, %v956
  %v958 = vmul.f32 %v950, %v785
  %v959 = vmul.f32 %v944, %v951
  %v960 = vadd.f32 %v958, %v959
  %v961 = vtanh.pop %v960
  %v962 = vmul.f32 %v957, %v961
  %s963 = scalar_lea.vmem %s0, 160
  %v964 = vld [vmem:[%s963] sm:$0xff]
  %v965 = vld [vmem:[%s963 + $0x8] sm:$0xff]
  %v966 = vld [vmem:[%s963 + $0x10] sm:$0xff]
  %v967 = vld [vmem:[%s963 + $0x18] sm:$0xff]
  %968 = vmatprep.subr.mxu0 %v84
  %969 = vmatpush1.msra.mxu0 %v83
  %970 = vmatprep.subr.mxu0 %v80
  %971 = vmatpush1.msra.mxu0 %v79
  %972 = vmatprep.subr.mxu0 %v76
  %973 = vmatpush1.msra.mxu0 %v75
  %974 = vmatprep.subr.mxu0 %v72
  %975 = vmatpush1.msra.mxu0 %v71
  %976 = vmatprep.subr.mxu0 %v68
  %977 = vmatpush1.msra.mxu0 %v67
  %978 = vmatprep.subr.mxu0 %v64
  %979 = vmatpush1.msra.mxu0 %v63
  %980 = vmatprep.subr.mxu0 %v60
  %981 = vmatpush1.msra.mxu0 %v59
  %982 = vmatprep.subr.mxu0 %v56
  %983 = vmatpush1.msra.mxu0 %v55
  %984 = vmatprep.subr.mxu0 %v52
  %985 = vmatpush1.msra.mxu0 %v51
  %986 = vmatprep.subr.mxu0 %v48
  %987 = vmatpush1.msra.mxu0 %v47
  %988 = vmatprep.subr.mxu0 %v44
  %989 = vmatpush1.msra.mxu0 %v43
  %990 = vmatprep.subr.mxu0 %v40
  %991 = vmatpush1.msra.mxu0 %v39
  %992 = vmatprep.subr.mxu0 %v36
  %993 = vmatpush1.msra.mxu0 %v35
  %994 = vmatprep.subr.mxu0 %v32
  %995 = vmatpush1.msra.mxu0 %v31
  %996 = vmatprep.subr.mxu0 %v28
  %997 = vmatpush1.msra.mxu0 %v27
  %998 = vmatprep.subr.mxu0 %v24
  %999 = vmatpush1.msra.mxu0 %v23
  %1000 = vmatprep.subr.mxu0 0.0
  %1001 = vmatpush2.msra.mxu0 0.0
  %1002 = vmatprep.subr.mxu0 0.0
  %1003 = vmatpush2.msra.mxu0 0.0
  %1004 = vmatprep.subr.mxu0 0.0
  %1005 = vmatpush2.msra.mxu0 0.0
  %1006 = vmatprep.subr.mxu0 0.0
  %1007 = vmatpush2.msra.mxu0 0.0
  %1008 = vmatprep.subr.mxu0 0.0
  %1009 = vmatpush2.msra.mxu0 0.0
  %1010 = vmatprep.subr.mxu0 0.0
  %1011 = vmatpush2.msra.mxu0 0.0
  %1012 = vmatprep.subr.mxu0 0.0
  %1013 = vmatpush2.msra.mxu0 0.0
  %1014 = vmatprep.subr.mxu0 0.0
  %1015 = vmatpush2.msra.mxu0 0.0
  %1016 = vmatprep.subr.mxu0 0.0
  %1017 = vmatpush2.msra.mxu0 0.0
  %1018 = vmatprep.subr.mxu0 0.0
  %1019 = vmatpush2.msra.mxu0 0.0
  %1020 = vmatprep.subr.mxu0 0.0
  %1021 = vmatpush2.msra.mxu0 0.0
  %1022 = vmatprep.subr.mxu0 0.0
  %1023 = vmatpush2.msra.mxu0 0.0
  %1024 = vmatprep.subr.mxu0 0.0
  %1025 = vmatpush2.msra.mxu0 0.0
  %1026 = vmatprep.subr.mxu0 0.0
  %1027 = vmatpush2.msra.mxu0 0.0
  %1028 = vmatprep.subr.mxu0 0.0
  %1029 = vmatpush2.msra.mxu0 0.0
  %1030 = vmatprep.subr.mxu0 0.0
  %1031 = vmatpush2.msra.mxu0 0.0
  %1032 = vmatprep.mubr.f32.mxu0 0.0
  %1033 = vmatmul.mubr.f32.gmra.mxu0 %v962
  %v1034 = vpop.f32.mrf.mxu0
  %v1035 = vadd.f32 0.0, %v1034
  %v1036 = vpop.f32.mrf.mxu0
  %v1037 = vadd.f32 0.0, %v1036
  %1038 = vdwg.mxu0
  %1039 = vmatprep.subr.mxu0 %v86
  %1040 = vmatpush1.msra.mxu0 %v85
  %1041 = vmatprep.subr.mxu0 %v82
  %1042 = vmatpush1.msra.mxu0 %v81
  %1043 = vmatprep.subr.mxu0 %v78
  %1044 = vmatpush1.msra.mxu0 %v77
  %1045 = vmatprep.subr.mxu0 %v74
  %1046 = vmatpush1.msra.mxu0 %v73
  %1047 = vmatprep.subr.mxu0 %v70
  %1048 = vmatpush1.msra.mxu0 %v69
  %1049 = vmatprep.subr.mxu0 %v66
  %1050 = vmatpush1.msra.mxu0 %v65
  %1051 = vmatprep.subr.mxu0 %v62
  %1052 = vmatpush1.msra.mxu0 %v61
  %1053 = vmatprep.subr.mxu0 %v58
  %1054 = vmatpush1.msra.mxu0 %v57
  %1055 = vmatprep.subr.mxu0 %v54
  %1056 = vmatpush1.msra.mxu0 %v53
  %1057 = vmatprep.subr.mxu0 %v50
  %1058 = vmatpush1.msra.mxu0 %v49
  %1059 = vmatprep.subr.mxu0 %v46
  %1060 = vmatpush1.msra.mxu0 %v45
  %1061 = vmatprep.subr.mxu0 %v42
  %1062 = vmatpush1.msra.mxu0 %v41
  %1063 = vmatprep.subr.mxu0 %v38
  %1064 = vmatpush1.msra.mxu0 %v37
  %1065 = vmatprep.subr.mxu0 %v34
  %1066 = vmatpush1.msra.mxu0 %v33
  %1067 = vmatprep.subr.mxu0 %v30
  %1068 = vmatpush1.msra.mxu0 %v29
  %1069 = vmatprep.subr.mxu0 %v26
  %1070 = vmatpush1.msra.mxu0 %v25
  %1071 = vmatprep.subr.mxu0 0.0
  %1072 = vmatpush2.msra.mxu0 0.0
  %1073 = vmatprep.subr.mxu0 0.0
  %1074 = vmatpush2.msra.mxu0 0.0
  %1075 = vmatprep.subr.mxu0 0.0
  %1076 = vmatpush2.msra.mxu0 0.0
  %1077 = vmatprep.subr.mxu0 0.0
  %1078 = vmatpush2.msra.mxu0 0.0
  %1079 = vmatprep.subr.mxu0 0.0
  %1080 = vmatpush2.msra.mxu0 0.0
  %1081 = vmatprep.subr.mxu0 0.0
  %1082 = vmatpush2.msra.mxu0 0.0
  %1083 = vmatprep.subr.mxu0 0.0
  %1084 = vmatpush2.msra.mxu0 0.0
  %1085 = vmatprep.subr.mxu0 0.0
  %1086 = vmatpush2.msra.mxu0 0.0
  %1087 = vmatprep.subr.mxu0 0.0
  %1088 = vmatpush2.msra.mxu0 0.0
  %1089 = vmatprep.subr.mxu0 0.0
  %1090 = vmatpush2.msra.mxu0 0.0
  %1091 = vmatprep.subr.mxu0 0.0
  %1092 = vmatpush2.msra.mxu0 0.0
  %1093 = vmatprep.subr.mxu0 0.0
  %1094 = vmatpush2.msra.mxu0 0.0
  %1095 = vmatprep.subr.mxu0 0.0
  %1096 = vmatpush2.msra.mxu0 0.0
  %1097 = vmatprep.subr.mxu0 0.0
  %1098 = vmatpush2.msra.mxu0 0.0
  %1099 = vmatprep.subr.mxu0 0.0
  %1100 = vmatpush2.msra.mxu0 0.0
  %1101 = vmatprep.subr.mxu0 0.0
  %1102 = vmatpush2.msra.mxu0 0.0
  %1103 = vmatprep.mubr.f32.mxu0 0.0
  %1104 = vmatmul.mubr.f32.gmra.mxu0 %v962
  %v1105 = vpop.f32.mrf.mxu0
  %v1106 = vadd.f32 0.0, %v1105
  %v1107 = vpop.f32.mrf.mxu0
  %v1108 = vadd.f32 0.0, %v1107
  %1109 = vdwg.mxu0
  %v1110 = vadd.f32 %v964, %v1035
  %v1111 = vadd.f32 %v965, %v1037
  %v1112 = vadd.f32 %v966, %v1106
  %v1113 = vadd.f32 %v967, %v1108
  %v1114 = vxor.u32 %v1110, 2147483648
  %v1115 = vmul.f32 %v1114, 1.442695
  %v1116 = vpow.pop %v1115
  %v1117 = vadd.f32 %v1116, 1.0
  %v1118 = vrcp.pop %v1117
  %v1119 = vmul.f32 1.0, %v1118
  %v1120 = vxor.u32 %v1111, 2147483648
  %v1121 = vmul.f32 %v1120, 1.442695
  %v1122 = vpow.pop %v1121
  %v1123 = vadd.f32 %v1122, 1.0
  %v1124 = vrcp.pop %v1123
  %v1125 = vmul.f32 1.0, %v1124
  %v1126 = vtanh.pop %v1112
  %v1127 = vxor.u32 %v1113, 2147483648
  %v1128 = vmul.f32 %v1127, 1.442695
  %v1129 = vpow.pop %v1128
  %v1130 = vadd.f32 %v1129, 1.0
  %v1131 = vrcp.pop %v1130
  %v1132 = vmul.f32 1.0, %v1131
  %v1133 = vmul.f32 %v1125, %v960
  %v1134 = vmul.f32 %v1119, %v1126
  %v1135 = vadd.f32 %v1133, %v1134
  %v1136 = vtanh.pop %v1135
  %v1137 = vmul.f32 %v1132, %v1136
  %s1138 = scalar_lea.vmem %s0, 192
  %v1139 = vld [vmem:[%s1138] sm:$0xff]
  %v1140 = vld [vmem:[%s1138 + $0x8] sm:$0xff]
  %v1141 = vld [vmem:[%s1138 + $0x10] sm:$0xff]
  %v1142 = vld [vmem:[%s1138 + $0x18] sm:$0xff]
  %1143 = vmatprep.subr.mxu0 %v84
  %1144 = vmatpush1.msra.mxu0 %v83
  %1145 = vmatprep.subr.mxu0 %v80
  %1146 = vmatpush1.msra.mxu0 %v79
  %1147 = vmatprep.subr.mxu0 %v76
  %1148 = vmatpush1.msra.mxu0 %v75
  %1149 = vmatprep.subr.mxu0 %v72
  %1150 = vmatpush1.msra.mxu0 %v71
  %1151 = vmatprep.subr.mxu0 %v68
  %1152 = vmatpush1.msra.mxu0 %v67
  %1153 = vmatprep.subr.mxu0 %v64
  %1154 = vmatpush1.msra.mxu0 %v63
  %1155 = vmatprep.subr.mxu0 %v60
  %1156 = vmatpush1.msra.mxu0 %v59
  %1157 = vmatprep.subr.mxu0 %v56
  %1158 = vmatpush1.msra.mxu0 %v55
  %1159 = vmatprep.subr.mxu0 %v52
  %1160 = vmatpush1.msra.mxu0 %v51
  %1161 = vmatprep.subr.mxu0 %v48
  %1162 = vmatpush1.msra.mxu0 %v47
  %1163 = vmatprep.subr.mxu0 %v44
  %1164 = vmatpush1.msra.mxu0 %v43
  %1165 = vmatprep.subr.mxu0 %v40
  %1166 = vmatpush1.msra.mxu0 %v39
  %1167 = vmatprep.subr.mxu0 %v36
  %1168 = vmatpush1.msra.mxu0 %v35
  %1169 = vmatprep.subr.mxu0 %v32
  %1170 = vmatpush1.msra.mxu0 %v31
  %1171 = vmatprep.subr.mxu0 %v28
  %1172 = vmatpush1.msra.mxu0 %v27
  %1173 = vmatprep.subr.mxu0 %v24
  %1174 = vmatpush1.msra.mxu0 %v23
  %1175 = vmatprep.subr.mxu0 0.0
  %1176 = vmatpush2.msra.mxu0 0.0
  %1177 = vmatprep.subr.mxu0 0.0
  %1178 = vmatpush2.msra.mxu0 0.0
  %1179 = vmatprep.subr.mxu0 0.0
  %1180 = vmatpush2.msra.mxu0 0.0
  %1181 = vmatprep.subr.mxu0 0.0
  %1182 = vmatpush2.msra.mxu0 0.0
  %1183 = vmatprep.subr.mxu0 0.0
  %1184 = vmatpush2.msra.mxu0 0.0
  %1185 = vmatprep.subr.mxu0 0.0
  %1186 = vmatpush2.msra.mxu0 0.0
  %1187 = vmatprep.subr.mxu0 0.0
  %1188 = vmatpush2.msra.mxu0 0.0
  %1189 = vmatprep.subr.mxu0 0.0
  %1190 = vmatpush2.msra.mxu0 0.0
  %1191 = vmatprep.subr.mxu0 0.0
  %1192 = vmatpush2.msra.mxu0 0.0
  %1193 = vmatprep.subr.mxu0 0.0
  %1194 = vmatpush2.msra.mxu0 0.0
  %1195 = vmatprep.subr.mxu0 0.0
  %1196 = vmatpush2.msra.mxu0 0.0
  %1197 = vmatprep.subr.mxu0 0.0
  %1198 = vmatpush2.msra.mxu0 0.0
  %1199 = vmatprep.subr.mxu0 0.0
  %1200 = vmatpush2.msra.mxu0 0.0
  %1201 = vmatprep.subr.mxu0 0.0
  %1202 = vmatpush2.msra.mxu0 0.0
  %1203 = vmatprep.subr.mxu0 0.0
  %1204 = vmatpush2.msra.mxu0 0.0
  %1205 = vmatprep.subr.mxu0 0.0
  %1206 = vmatpush2.msra.mxu0 0.0
  %1207 = vmatprep.mubr.f32.mxu0 0.0
  %1208 = vmatmul.mubr.f32.gmra.mxu0 %v1137
  %v1209 = vpop.f32.mrf.mxu0
  %v1210 = vadd.f32 0.0, %v1209
  %v1211 = vpop.f32.mrf.mxu0
  %v1212 = vadd.f32 0.0, %v1211
  %1213 = vdwg.mxu0
  %1214 = vmatprep.subr.mxu0 %v86
  %1215 = vmatpush1.msra.mxu0 %v85
  %1216 = vmatprep.subr.mxu0 %v82
  %1217 = vmatpush1.msra.mxu0 %v81
  %1218 = vmatprep.subr.mxu0 %v78
  %1219 = vmatpush1.msra.mxu0 %v77
  %1220 = vmatprep.subr.mxu0 %v74
  %1221 = vmatpush1.msra.mxu0 %v73
  %1222 = vmatprep.subr.mxu0 %v70
  %1223 = vmatpush1.msra.mxu0 %v69
  %1224 = vmatprep.subr.mxu0 %v66
  %1225 = vmatpush1.msra.mxu0 %v65
  %1226 = vmatprep.subr.mxu0 %v62
  %1227 = vmatpush1.msra.mxu0 %v61
  %1228 = vmatprep.subr.mxu0 %v58
  %1229 = vmatpush1.msra.mxu0 %v57
  %1230 = vmatprep.subr.mxu0 %v54
  %1231 = vmatpush1.msra.mxu0 %v53
  %1232 = vmatprep.subr.mxu0 %v50
  %1233 = vmatpush1.msra.mxu0 %v49
  %1234 = vmatprep.subr.mxu0 %v46
  %1235 = vmatpush1.msra.mxu0 %v45
  %1236 = vmatprep.subr.mxu0 %v42
  %1237 = vmatpush1.msra.mxu0 %v41
  %1238 = vmatprep.subr.mxu0 %v38
  %1239 = vmatpush1.msra.mxu0 %v37
  %1240 = vmatprep.subr.mxu0 %v34
  %1241 = vmatpush1.msra.mxu0 %v33
  %1242 = vmatprep.subr.mxu0 %v30
  %1243 = vmatpush1.msra.mxu0 %v29
  %1244 = vmatprep.subr.mxu0 %v26
  %1245 = vmatpush1.msra.mxu0 %v25
  %1246 = vmatprep.subr.mxu0 0.0
  %1247 = vmatpush2.msra.mxu0 0.0
  %1248 = vmatprep.subr.mxu0 0.0
  %1249 = vmatpush2.msra.mxu0 0.0
  %1250 = vmatprep.subr.mxu0 0.0
  %1251 = vmatpush2.msra.mxu0 0.0
  %1252 = vmatprep.subr.mxu0 0.0
  %1253 = vmatpush2.msra.mxu0 0.0
  %1254 = vmatprep.subr.mxu0 0.0
  %1255 = vmatpush2.msra.mxu0 0.0
  %1256 = vmatprep.subr.mxu0 0.0
  %1257 = vmatpush2.msra.mxu0 0.0
  %1258 = vmatprep.subr.mxu0 0.0
  %1259 = vmatpush2.msra.mxu0 0.0
  %1260 = vmatprep.subr.mxu0 0.0
  %1261 = vmatpush2.msra.mxu0 0.0
  %1262 = vmatprep.subr.mxu0 0.0
  %1263 = vmatpush2.msra.mxu0 0.0
  %1264 = vmatprep.subr.mxu0 0.0
  %1265 = vmatpush2.msra.mxu0 0.0
  %1266 = vmatprep.subr.mxu0 0.0
  %1267 = vmatpush2.msra.mxu0 0.0
  %1268 = vmatprep.subr.mxu0 0.0
  %1269 = vmatpush2.msra.mxu0 0.0
  %1270 = vmatprep.subr.mxu0 0.0
  %1271 = vmatpush2.msra.mxu0 0.0
  %1272 = vmatprep.subr.mxu0 0.0
  %1273 = vmatpush2.msra.mxu0 0.0
  %1274 = vmatprep.subr.mxu0 0.0
  %1275 = vmatpush2.msra.mxu0 0.0
  %1276 = vmatprep.subr.mxu0 0.0
  %1277 = vmatpush2.msra.mxu0 0.0
  %1278 = vmatprep.mubr.f32.mxu0 0.0
  %1279 = vmatmul.mubr.f32.gmra.mxu0 %v1137
  %v1280 = vpop.f32.mrf.mxu0
  %v1281 = vadd.f32 0.0, %v1280
  %v1282 = vpop.f32.mrf.mxu0
  %v1283 = vadd.f32 0.0, %v1282
  %1284 = vdwg.mxu0
  %v1285 = vadd.f32 %v1139, %v1210
  %v1286 = vadd.f32 %v1140, %v1212
  %v1287 = vadd.f32 %v1141, %v1281
  %v1288 = vadd.f32 %v1142, %v1283
  %v1289 = vxor.u32 %v1285, 2147483648
  %v1290 = vmul.f32 %v1289, 1.442695
  %v1291 = vpow.pop %v1290
  %v1292 = vadd.f32 %v1291, 1.0
  %v1293 = vrcp.pop %v1292
  %v1294 = vmul.f32 1.0, %v1293
  %v1295 = vxor.u32 %v1286, 2147483648
  %v1296 = vmul.f32 %v1295, 1.442695
  %v1297 = vpow.pop %v1296
  %v1298 = vadd.f32 %v1297, 1.0
  %v1299 = vrcp.pop %v1298
  %v1300 = vmul.f32 1.0, %v1299
  %v1301 = vtanh.pop %v1287
  %v1302 = vxor.u32 %v1288, 2147483648
  %v1303 = vmul.f32 %v1302, 1.442695
  %v1304 = vpow.pop %v1303
  %v1305 = vadd.f32 %v1304, 1.0
  %v1306 = vrcp.pop %v1305
  %v1307 = vmul.f32 1.0, %v1306
  %v1308 = vmul.f32 %v1300, %v1135
  %v1309 = vmul.f32 %v1294, %v1301
  %v1310 = vadd.f32 %v1308, %v1309
  %v1311 = vtanh.pop %v1310
  %v1312 = vmul.f32 %v1307, %v1311
  %s1313 = scalar_lea.vmem %s0, 224
  %v1314 = vld [vmem:[%s1313] sm:$0xff]
  %v1315 = vld [vmem:[%s1313 + $0x8] sm:$0xff]
  %v1316 = vld [vmem:[%s1313 + $0x10] sm:$0xff]
  %v1317 = vld [vmem:[%s1313 + $0x18] sm:$0xff]
  %1318 = vmatprep.subr.mxu0 %v84
  %1319 = vmatpush1.msra.mxu0 %v83
  %1320 = vmatprep.subr.mxu0 %v80
  %1321 = vmatpush1.msra.mxu0 %v79
  %1322 = vmatprep.subr.mxu0 %v76
  %1323 = vmatpush1.msra.mxu0 %v75
  %1324 = vmatprep.subr.mxu0 %v72
  %1325 = vmatpush1.msra.mxu0 %v71
  %1326 = vmatprep.subr.mxu0 %v68
  %1327 = vmatpush1.msra.mxu0 %v67
  %1328 = vmatprep.subr.mxu0 %v64
  %1329 = vmatpush1.msra.mxu0 %v63
  %1330 = vmatprep.subr.mxu0 %v60
  %1331 = vmatpush1.msra.mxu0 %v59
  %1332 = vmatprep.subr.mxu0 %v56
  %1333 = vmatpush1.msra.mxu0 %v55
  %1334 = vmatprep.subr.mxu0 %v52
  %1335 = vmatpush1.msra.mxu0 %v51
  %1336 = vmatprep.subr.mxu0 %v48
  %1337 = vmatpush1.msra.mxu0 %v47
  %1338 = vmatprep.subr.mxu0 %v44
  %1339 = vmatpush1.msra.mxu0 %v43
  %1340 = vmatprep.subr.mxu0 %v40
  %1341 = vmatpush1.msra.mxu0 %v39
  %1342 = vmatprep.subr.mxu0 %v36
  %1343 = vmatpush1.msra.mxu0 %v35
  %1344 = vmatprep.subr.mxu0 %v32
  %1345 = vmatpush1.msra.mxu0 %v31
  %1346 = vmatprep.subr.mxu0 %v28
  %1347 = vmatpush1.msra.mxu0 %v27
  %1348 = vmatprep.subr.mxu0 %v24
  %1349 = vmatpush1.msra.mxu0 %v23
  %1350 = vmatprep.subr.mxu0 0.0
  %1351 = vmatpush2.msra.mxu0 0.0
  %1352 = vmatprep.subr.mxu0 0.0
  %1353 = vmatpush2.msra.mxu0 0.0
  %1354 = vmatprep.subr.mxu0 0.0
  %1355 = vmatpush2.msra.mxu0 0.0
  %1356 = vmatprep.subr.mxu0 0.0
  %1357 = vmatpush2.msra.mxu0 0.0
  %1358 = vmatprep.subr.mxu0 0.0
  %1359 = vmatpush2.msra.mxu0 0.0
  %1360 = vmatprep.subr.mxu0 0.0
  %1361 = vmatpush2.msra.mxu0 0.0
  %1362 = vmatprep.subr.mxu0 0.0
  %1363 = vmatpush2.msra.mxu0 0.0
  %1364 = vmatprep.subr.mxu0 0.0
  %1365 = vmatpush2.msra.mxu0 0.0
  %1366 = vmatprep.subr.mxu0 0.0
  %1367 = vmatpush2.msra.mxu0 0.0
  %1368 = vmatprep.subr.mxu0 0.0
  %1369 = vmatpush2.msra.mxu0 0.0
  %1370 = vmatprep.subr.mxu0 0.0
  %1371 = vmatpush2.msra.mxu0 0.0
  %1372 = vmatprep.subr.mxu0 0.0
  %1373 = vmatpush2.msra.mxu0 0.0
  %1374 = vmatprep.subr.mxu0 0.0
  %1375 = vmatpush2.msra.mxu0 0.0
  %1376 = vmatprep.subr.mxu0 0.0
  %1377 = vmatpush2.msra.mxu0 0.0
  %1378 = vmatprep.subr.mxu0 0.0
  %1379 = vmatpush2.msra.mxu0 0.0
  %1380 = vmatprep.subr.mxu0 0.0
  %1381 = vmatpush2.msra.mxu0 0.0
  %1382 = vmatprep.mubr.f32.mxu0 0.0
  %1383 = vmatmul.mubr.f32.gmra.mxu0 %v1312
  %v1384 = vpop.f32.mrf.mxu0
  %v1385 = vadd.f32 0.0, %v1384
  %v1386 = vpop.f32.mrf.mxu0
  %v1387 = vadd.f32 0.0, %v1386
  %1388 = vdwg.mxu0
  %1389 = vmatprep.subr.mxu0 %v86
  %1390 = vmatpush1.msra.mxu0 %v85
  %1391 = vmatprep.subr.mxu0 %v82
  %1392 = vmatpush1.msra.mxu0 %v81
  %1393 = vmatprep.subr.mxu0 %v78
  %1394 = vmatpush1.msra.mxu0 %v77
  %1395 = vmatprep.subr.mxu0 %v74
  %1396 = vmatpush1.msra.mxu0 %v73
  %1397 = vmatprep.subr.mxu0 %v70
  %1398 = vmatpush1.msra.mxu0 %v69
  %1399 = vmatprep.subr.mxu0 %v66
  %1400 = vmatpush1.msra.mxu0 %v65
  %1401 = vmatprep.subr.mxu0 %v62
  %1402 = vmatpush1.msra.mxu0 %v61
  %1403 = vmatprep.subr.mxu0 %v58
  %1404 = vmatpush1.msra.mxu0 %v57
  %1405 = vmatprep.subr.mxu0 %v54
  %1406 = vmatpush1.msra.mxu0 %v53
  %1407 = vmatprep.subr.mxu0 %v50
  %1408 = vmatpush1.msra.mxu0 %v49
  %1409 = vmatprep.subr.mxu0 %v46
  %1410 = vmatpush1.msra.mxu0 %v45
  %1411 = vmatprep.subr.mxu0 %v42
  %1412 = vmatpush1.msra.mxu0 %v41
  %1413 = vmatprep.subr.mxu0 %v38
  %1414 = vmatpush1.msra.mxu0 %v37
  %1415 = vmatprep.subr.mxu0 %v34
  %1416 = vmatpush1.msra.mxu0 %v33
  %1417 = vmatprep.subr.mxu0 %v30
  %1418 = vmatpush1.msra.mxu0 %v29
  %1419 = vmatprep.subr.mxu0 %v26
  %1420 = vmatpush1.msra.mxu0 %v25
  %1421 = vmatprep.subr.mxu0 0.0
  %1422 = vmatpush2.msra.mxu0 0.0
  %1423 = vmatprep.subr.mxu0 0.0
  %1424 = vmatpush2.msra.mxu0 0.0
  %1425 = vmatprep.subr.mxu0 0.0
  %1426 = vmatpush2.msra.mxu0 0.0
  %1427 = vmatprep.subr.mxu0 0.0
  %1428 = vmatpush2.msra.mxu0 0.0
  %1429 = vmatprep.subr.mxu0 0.0
  %1430 = vmatpush2.msra.mxu0 0.0
  %1431 = vmatprep.subr.mxu0 0.0
  %1432 = vmatpush2.msra.mxu0 0.0
  %1433 = vmatprep.subr.mxu0 0.0
  %1434 = vmatpush2.msra.mxu0 0.0
  %1435 = vmatprep.subr.mxu0 0.0
  %1436 = vmatpush2.msra.mxu0 0.0
  %1437 = vmatprep.subr.mxu0 0.0
  %1438 = vmatpush2.msra.mxu0 0.0
  %1439 = vmatprep.subr.mxu0 0.0
  %1440 = vmatpush2.msra.mxu0 0.0
  %1441 = vmatprep.subr.mxu0 0.0
  %1442 = vmatpush2.msra.mxu0 0.0
  %1443 = vmatprep.subr.mxu0 0.0
  %1444 = vmatpush2.msra.mxu0 0.0
  %1445 = vmatprep.subr.mxu0 0.0
  %1446 = vmatpush2.msra.mxu0 0.0
  %1447 = vmatprep.subr.mxu0 0.0
  %1448 = vmatpush2.msra.mxu0 0.0
  %1449 = vmatprep.subr.mxu0 0.0
  %1450 = vmatpush2.msra.mxu0 0.0
  %1451 = vmatprep.subr.mxu0 0.0
  %1452 = vmatpush2.msra.mxu0 0.0
  %1453 = vmatprep.mubr.f32.mxu0 0.0
  %1454 = vmatmul.mubr.f32.gmra.mxu0 %v1312
  %v1455 = vpop.f32.mrf.mxu0
  %v1456 = vadd.f32 0.0, %v1455
  %v1457 = vpop.f32.mrf.mxu0
  %v1458 = vadd.f32 0.0, %v1457
  %1459 = vdwg.mxu0
  %v1460 = vadd.f32 %v1314, %v1385
  %v1461 = vadd.f32 %v1315, %v1387
  %v1462 = vadd.f32 %v1316, %v1456
  %v1463 = vadd.f32 %v1317, %v1458
  %v1464 = vxor.u32 %v1460, 2147483648
  %v1465 = vmul.f32 %v1464, 1.442695
  %v1466 = vpow.pop %v1465
  %v1467 = vadd.f32 %v1466, 1.0
  %v1468 = vrcp.pop %v1467
  %v1469 = vmul.f32 1.0, %v1468
  %v1470 = vxor.u32 %v1461, 2147483648
  %v1471 = vmul.f32 %v1470, 1.442695
  %v1472 = vpow.pop %v1471
  %v1473 = vadd.f32 %v1472, 1.0
  %v1474 = vrcp.pop %v1473
  %v1475 = vmul.f32 1.0, %v1474
  %v1476 = vtanh.pop %v1462
  %v1477 = vxor.u32 %v1463, 2147483648
  %v1478 = vmul.f32 %v1477, 1.442695
  %v1479 = vpow.pop %v1478
  %v1480 = vadd.f32 %v1479, 1.0
  %v1481 = vrcp.pop %v1480
  %v1482 = vmul.f32 1.0, %v1481
  %v1483 = vmul.f32 %v1475, %v1310
  %v1484 = vmul.f32 %v1469, %v1476
  %v1485 = vadd.f32 %v1483, %v1484
  %v1486 = vtanh.pop %v1485
  %v1487 = vmul.f32 %v1482, %v1486
  %1488 = vst [vmem:[#allocation2] sm:$0xff] %v1487
  %1489 = vst [vmem:[#allocation3] sm:$0xff] %v1485
  // Predicated region
  $region22: #{lstm_model_forward.1} parent=0 // pred_check
    %p1490 = pneg %p17
  $region23: #{lstm_model_forward.1} parent=0 // pred_check_branch
    %1492 = sbr.rel (%p1490) target = $region25
  $region24: #{lstm_model_forward.1} parent=0 // pred_region
    %v1493 = vld [vmem:[%s2] sm:$0xff]
    %v1494 = vld [vmem:[%s2 + $0x8] sm:$0xff]
    %v1495 = vld [vmem:[%s2 + $0x10] sm:$0xff]
    %v1496 = vld [vmem:[%s2 + $0x18] sm:$0xff]
    %v1497 = vld [vmem:[%s2 + $0x20] sm:$0xff]
    %v1498 = vld [vmem:[%s2 + $0x28] sm:$0xff]
    %v1499 = vld [vmem:[%s2 + $0x30] sm:$0xff]
    %v1500 = vld [vmem:[%s2 + $0x38] sm:$0xff]
    %v1501 = vld [vmem:[%s2 + $0x40] sm:$0xff]
    %v1502 = vld [vmem:[%s2 + $0x48] sm:$0xff]
    %v1503 = vld [vmem:[%s2 + $0x50] sm:$0xff]
    %v1504 = vld [vmem:[%s2 + $0x58] sm:$0xff]
    %v1505 = vld [vmem:[%s2 + $0x60] sm:$0xff]
    %v1506 = vld [vmem:[%s2 + $0x68] sm:$0xff]
    %v1507 = vld [vmem:[%s2 + $0x70] sm:$0xff]
    %v1508 = vld [vmem:[%s2 + $0x78] sm:$0xff]
    %v1509 = vld [vmem:[%s3] sm:$0x1]
    %v1511 = vlaneseq
    %v1512 = vshrl.u32 %v1511, 7
    %v1513 = vsub.s32 0, %v1512
    %v1514 = vrot.slane %v1509, %v1513
    %1516 = vmatprep.subr.mxu0 0.0
    %1517 = vmatpush1.msra.mxu0 %v1508
    %1518 = vmatprep.subr.mxu0 0.0
    %1519 = vmatpush1.msra.mxu0 %v1507
    %1520 = vmatprep.subr.mxu0 0.0
    %1521 = vmatpush1.msra.mxu0 %v1506
    %1522 = vmatprep.subr.mxu0 0.0
    %1523 = vmatpush1.msra.mxu0 %v1505
    %1524 = vmatprep.subr.mxu0 0.0
    %1525 = vmatpush1.msra.mxu0 %v1504
    %1526 = vmatprep.subr.mxu0 0.0
    %1527 = vmatpush1.msra.mxu0 %v1503
    %1528 = vmatprep.subr.mxu0 0.0
    %1529 = vmatpush1.msra.mxu0 %v1502
    %1530 = vmatprep.subr.mxu0 0.0
    %1531 = vmatpush1.msra.mxu0 %v1501
    %1532 = vmatprep.subr.mxu0 0.0
    %1533 = vmatpush1.msra.mxu0 %v1500
    %1534 = vmatprep.subr.mxu0 0.0
    %1535 = vmatpush1.msra.mxu0 %v1499
    %1536 = vmatprep.subr.mxu0 0.0
    %1537 = vmatpush1.msra.mxu0 %v1498
    %1538 = vmatprep.subr.mxu0 0.0
    %1539 = vmatpush1.msra.mxu0 %v1497
    %1540 = vmatprep.subr.mxu0 0.0
    %1541 = vmatpush1.msra.mxu0 %v1496
    %1542 = vmatprep.subr.mxu0 0.0
    %1543 = vmatpush1.msra.mxu0 %v1495
    %1544 = vmatprep.subr.mxu0 0.0
    %1545 = vmatpush1.msra.mxu0 %v1494
    %1546 = vmatprep.subr.mxu0 0.0
    %1547 = vmatpush1.msra.mxu0 %v1493
    %1548 = vmatprep.subr.mxu0 0.0
    %1549 = vmatpush2.msra.mxu0 0.0
    %1550 = vmatprep.subr.mxu0 0.0
    %1551 = vmatpush2.msra.mxu0 0.0
    %1552 = vmatprep.subr.mxu0 0.0
    %1553 = vmatpush2.msra.mxu0 0.0
    %1554 = vmatprep.subr.mxu0 0.0
    %1555 = vmatpush2.msra.mxu0 0.0
    %1556 = vmatprep.subr.mxu0 0.0
    %1557 = vmatpush2.msra.mxu0 0.0
    %1558 = vmatprep.subr.mxu0 0.0
    %1559 = vmatpush2.msra.mxu0 0.0
    %1560 = vmatprep.subr.mxu0 0.0
    %1561 = vmatpush2.msra.mxu0 0.0
    %1562 = vmatprep.subr.mxu0 0.0
    %1563 = vmatpush2.msra.mxu0 0.0
    %1564 = vmatprep.subr.mxu0 0.0
    %1565 = vmatpush2.msra.mxu0 0.0
    %1566 = vmatprep.subr.mxu0 0.0
    %1567 = vmatpush2.msra.mxu0 0.0
    %1568 = vmatprep.subr.mxu0 0.0
    %1569 = vmatpush2.msra.mxu0 0.0
    %1570 = vmatprep.subr.mxu0 0.0
    %1571 = vmatpush2.msra.mxu0 0.0
    %1572 = vmatprep.subr.mxu0 0.0
    %1573 = vmatpush2.msra.mxu0 0.0
    %1574 = vmatprep.subr.mxu0 0.0
    %1575 = vmatpush2.msra.mxu0 0.0
    %1576 = vmatprep.subr.mxu0 0.0
    %1577 = vmatpush2.msra.mxu0 0.0
    %1578 = vmatprep.subr.mxu0 0.0
    %1579 = vmatpush2.msra.mxu0 0.0
    %1580 = vmatprep.mubr.f32.mxu0 0.0
    %1581 = vmatmul.mubr.f32.gmra.mxu0 %v1487
    %v1582 = vpop.f32.mrf.mxu0
    %v1583 = vadd.f32 %v1514, %v1582
    %v1584 = vpop.f32.mrf.mxu0
    %1585 = vdwg.mxu0
    %1586 = vst [vmem:[%s4] sm:$0xff] %v1583
  $region25: #{lstm_model_forward.1} parent=0 // pred_fallthru
    _
  // Predicated region
  $region26: #{lstm_model_forward.1} parent=0 // pred_check
    _
  $region27: #{lstm_model_forward.1} parent=0 // pred_check_branch
    %1588 = sbr.rel (0) target = $region29
  $region28: #{lstm_model_forward.1} parent=0 // pred_region
    _
  $region29: #{lstm_model_forward.1} parent=0 // pred_fallthru
    _
  // Predicated region
  $region30: #{lstm_model_forward.1} parent=0 // pred_check
    _
  $region31: #{lstm_model_forward.1} parent=0 // pred_check_branch
    %1590 = sbr.rel (0) target = $region33
  $region32: #{lstm_model_forward.1} parent=0 // pred_region
    _
  $region33: #{lstm_model_forward.1} parent=0 // pred_fallthru
    _

</llo_original>
